<compile_context>
chip_gen: v6e
topology: v6e:2x2x1
jax: 0.10.0
libtpu: 0.0.40
codegen_flags: <defaults>
</compile_context>

<pallas_src>
import jax
import jax.numpy as jnp
from jax.experimental import pallas as pl
from jax.experimental.pallas import tpu as pltpu


def server_head_kernel(x_ref, w1_ref, b1_ref, w2_ref, b2_ref, o_ref):
    # x_ref:  (tb, D_in) f32      w1_ref: (D_in, H) f32
    # b1_ref: (1, H) f32          w2_ref: (1, H) f32     b2_ref: (1,) f32 in SMEM
    # o_ref:  (tb, 1) f32
    h = jnp.dot(x_ref[...], w1_ref[...],
                preferred_element_type=jnp.float32)           # (tb, H)  MXU, f32 acc
    h = jnp.maximum(h + b1_ref[...], 0.0)                     # bias + ReLU (VPU)
    # Second "matmul" (tb,H)@(H,1): VPU multiply + per-row reduce, keepdims so
    # the result is already a (tb, 1) column (no sublane->lane relayout).
    z = jnp.sum(h * w2_ref[...], axis=-1, keepdims=True) + b2_ref[0]
    o_ref[...] = jax.nn.sigmoid(z).astype(o_ref.dtype)        # EUP sigmoid


def _num_tensorcores():
    """2 TensorCores per chip on v7x, 1 on v5e/v6e (best-effort detection)."""
    try:
        kind = jax.devices()[0].device_kind.lower()
        return 2 if "7" in kind else 1
    except Exception:  # pragma: no cover - defensive
        return 1


def server_gafm_forward(x, w1, b1, w2, b2, *, num_batch_tiles=None):
    """Pallas implementation of Server_GAFM.forward(intermidiate_to_server)."""
    B, D_in = x.shape
    H = w1.shape[1]

    if num_batch_tiles is None:
        num_batch_tiles = _num_tensorcores()
    # Never ask for more tiles than there are 8-row sublane groups.
    num_batch_tiles = max(1, min(num_batch_tiles, pl.cdiv(B, 8)))

    if num_batch_tiles == 1:
        tb = B                                   # full batch, one grid step
    else:
        tb = ((pl.cdiv(B, num_batch_tiles) + 7) // 8) * 8   # sublane-aligned
    grid = (pl.cdiv(B, tb),)                      # partial last block is masked

    x_f = x.astype(jnp.float32)                   # no-op when already f32
    w1_f = w1.astype(jnp.float32)
    b1_r = b1.reshape(1, H).astype(jnp.float32)
    w2_row = w2.reshape(1, H).astype(jnp.float32)
    b2_s = b2.reshape(1).astype(jnp.float32)

    return pl.pallas_call(
        server_head_kernel,
        out_shape=jax.ShapeDtypeStruct((B, 1), jnp.float32),
        grid_spec=pltpu.PrefetchScalarGridSpec(
            num_scalar_prefetch=0,
            grid=grid,
            in_specs=[
                pl.BlockSpec((tb, D_in), lambda i: (i, 0)),   # x: tiled over batch
                pl.BlockSpec((D_in, H), lambda i: (0, 0)),    # W1: resident
                pl.BlockSpec((1, H), lambda i: (0, 0)),       # b1: resident
                pl.BlockSpec((1, H), lambda i: (0, 0)),       # W2 row: resident
                pl.BlockSpec(memory_space=pltpu.MemorySpace.SMEM),  # b2 scalar
            ],
            out_specs=pl.BlockSpec((tb, 1), lambda i: (i, 0)),
        ),
        compiler_params=pltpu.CompilerParams(
            dimension_semantics=("parallel",),     # 1 tile/TC on v7x
        ),
    )(x_f, w1_f, b1_r, w2_row, b2_s)


def init_server_params(key, d_in, hidden):
    """Deterministic init mimicking torch.nn.Linear default (U[-1/sqrt(fan_in), +])."""
    k1, k2, k3, k4 = jax.random.split(key, 4)
    lim1 = 1.0 / jnp.sqrt(jnp.float32(d_in))
    lim2 = 1.0 / jnp.sqrt(jnp.float32(hidden))
    w1 = jax.random.uniform(k1, (d_in, hidden), jnp.float32, -lim1, lim1)
    b1 = jax.random.uniform(k2, (1, hidden), jnp.float32, -lim1, lim1)
    w2 = jax.random.uniform(k3, (hidden, 1), jnp.float32, -lim2, lim2)
    b2 = jax.random.uniform(k4, (1, 1), jnp.float32, -lim2, lim2)
    return w1, b1, w2, b2


if __name__ == "__main__":
    key = jax.random.PRNGKey(0)
    k_x, k_p = jax.random.split(key)

    # SplitNN-head shapes: Criteo-like intermediate activations (B, 32) -> (B, 1).
    B, D_IN, HIDDEN = 1024, 32, 32
    x = jax.random.normal(k_x, (B, D_IN), jnp.float32)   # intermidiate_to_server
    w1, b1, w2, b2 = init_server_params(k_p, D_IN, HIDDEN)

    out = jax.block_until_ready(server_gafm_forward(x, w1, b1, w2, b2))
    assert out.shape == (B, 1)

    # Pure-f32 reference (same math as the PyTorch head). Small tolerance slack
    # for MXU vs. XLA f32-matmul rounding.
    ref = jax.nn.sigmoid(jnp.maximum(x @ w1 + b1, 0.0) @ w2 + b2)
    assert jnp.max(jnp.abs(out - ref)) < 3e-3

    # Ragged batch: no wrapper-side padding, partial last block is masked by Pallas.
    B2 = 1000
    out2 = jax.block_until_ready(server_gafm_forward(x[:B2], w1, b1, w2, b2))
    assert out2.shape == (B2, 1)
    assert jnp.max(jnp.abs(out2 - ref[:B2])) < 3e-3

    print("KERNEL_OK")
</pallas_src>

<mosaic_0001>
module attributes {stable_mosaic.version = 11 : i64} {
  func.func @server_head_kernel(%arg0: i32, %arg1: memref<1024x32xf32, #tpu.memory_space<vmem>>, %arg2: memref<32x32xf32, #tpu.memory_space<vmem>>, %arg3: memref<1x32xf32, #tpu.memory_space<vmem>>, %arg4: memref<1x32xf32, #tpu.memory_space<vmem>>, %arg5: memref<1xf32, #tpu.memory_space<smem>>, %arg6: memref<1024x1xf32, #tpu.memory_space<vmem>>) attributes {dimension_semantics = [#tpu.dimension_semantics<parallel>], iteration_bounds = array<i64: 1>, scalar_prefetch = 0 : i64, scratch_operands = 0 : i64, tpu.core_type = #tpu.core_type<tc>, window_params = [{transform_indices = @transform_0, window_bounds = array<i64: 1024, 32>}, {pipeline_mode = #tpu.pipeline_mode<synchronous>, transform_indices = @transform_1, window_bounds = array<i64: 32, 32>}, {pipeline_mode = #tpu.pipeline_mode<synchronous>, transform_indices = @transform_2, window_bounds = array<i64: 1, 32>}, {pipeline_mode = #tpu.pipeline_mode<synchronous>, transform_indices = @transform_3, window_bounds = array<i64: 1, 32>}, {transform_indices = @transform_4, window_bounds = array<i64: 1>}, {transform_indices = @transform_5, window_bounds = array<i64: 1024, 1>}]} {
    %c0 = arith.constant 0 : index
    %c0_0 = arith.constant 0 : index
    %0 = vector.load %arg1[%c0, %c0_0] : memref<1024x32xf32, #tpu.memory_space<vmem>>, vector<1024x32xf32>
    %c0_1 = arith.constant 0 : index
    %c0_2 = arith.constant 0 : index
    %1 = vector.load %arg2[%c0_1, %c0_2] : memref<32x32xf32, #tpu.memory_space<vmem>>, vector<32x32xf32>
    %cst = arith.constant dense<0.000000e+00> : vector<1024x32xf32>
    %2 = tpu.matmul %0, %1, %cst {dimension_numbers = #tpu.dot_dimension_numbers<[1], [0], [0], [1], [0, 0, 1, 1], [], []>} : vector<1024x32xf32>, vector<32x32xf32>, vector<1024x32xf32> -> vector<1024x32xf32>
    %c0_3 = arith.constant 0 : index
    %c0_4 = arith.constant 0 : index
    %3 = vector.load %arg3[%c0_3, %c0_4] : memref<1x32xf32, #tpu.memory_space<vmem>>, vector<1x32xf32>
    %4 = vector.broadcast %3 : vector<1x32xf32> to vector<1024x32xf32>
    %5 = arith.addf %2, %4 : vector<1024x32xf32>
    %cst_5 = arith.constant 0.000000e+00 : f32
    %6 = vector.broadcast %cst_5 : f32 to vector<1024x32xf32>
    %7 = arith.maximumf %5, %6 : vector<1024x32xf32>
    %c0_6 = arith.constant 0 : index
    %c0_7 = arith.constant 0 : index
    %8 = vector.load %arg4[%c0_6, %c0_7] : memref<1x32xf32, #tpu.memory_space<vmem>>, vector<1x32xf32>
    %9 = vector.broadcast %8 : vector<1x32xf32> to vector<1024x32xf32>
    %10 = arith.mulf %7, %9 : vector<1024x32xf32>
    %cst_8 = arith.constant dense<0.000000e+00> : vector<1024xf32>
    %11 = vector.multi_reduction <add>, %10, %cst_8 [1] : vector<1024x32xf32> to vector<1024xf32>
    %12 = vector.shape_cast %11 : vector<1024xf32> to vector<1024x1xf32>
    %c0_9 = arith.constant 0 : index
    %13 = memref.load %arg5[%c0_9] : memref<1xf32, #tpu.memory_space<smem>>
    %14 = vector.broadcast %13 : f32 to vector<1024x1xf32>
    %15 = arith.addf %12, %14 : vector<1024x1xf32>
    %16 = arith.negf %15 : vector<1024x1xf32>
    %17 = math.exp %16 : vector<1024x1xf32>
    %cst_10 = arith.constant 1.000000e+00 : f32
    %18 = vector.broadcast %cst_10 : f32 to vector<1024x1xf32>
    %19 = arith.addf %18, %17 : vector<1024x1xf32>
    %20 = arith.divf %18, %19 : vector<1024x1xf32>
    %c0_11 = arith.constant 0 : index
    %c0_12 = arith.constant 0 : index
    %21 = vector.load %arg6[%c0_11, %c0_12] : memref<1024x1xf32, #tpu.memory_space<vmem>>, vector<1024x1xf32>
    tpu.vector_store %arg6[%c0_11, %c0_12], %20 {strides = array<i32>} : memref<1024x1xf32, #tpu.memory_space<vmem>>, vector<1024x1xf32>,
    return
  }
  func.func @transform_0(%arg0: i32) -> (i32, i32) {
    %c0_i32 = arith.constant 0 : i32
    %c0_i32_0 = arith.constant 0 : i32
    return %arg0, %c0_i32 : i32, i32
  }
  func.func @transform_1(%arg0: i32) -> (i32, i32) {
    %c0_i32 = arith.constant 0 : i32
    %c0_i32_0 = arith.constant 0 : i32
    %c0_i32_1 = arith.constant 0 : i32
    return %c0_i32, %c0_i32_0 : i32, i32
  }
  func.func @transform_2(%arg0: i32) -> (i32, i32) {
    %c0_i32 = arith.constant 0 : i32
    %c0_i32_0 = arith.constant 0 : i32
    %c0_i32_1 = arith.constant 0 : i32
    return %c0_i32, %c0_i32_0 : i32, i32
  }
  func.func @transform_3(%arg0: i32) -> (i32, i32) {
    %c0_i32 = arith.constant 0 : i32
    %c0_i32_0 = arith.constant 0 : i32
    %c0_i32_1 = arith.constant 0 : i32
    return %c0_i32, %c0_i32_0 : i32, i32
  }
  func.func @transform_4(%arg0: i32) -> i32 {
    %c0_i32 = arith.constant 0 : i32
    %c0_i32_0 = arith.constant 0 : i32
    return %c0_i32 : i32
  }
  func.func @transform_5(%arg0: i32) -> (i32, i32) {
    %c0_i32 = arith.constant 0 : i32
    %c0_i32_0 = arith.constant 0 : i32
    return %arg0, %c0_i32 : i32, i32
  }
}

</mosaic_0001>

<llo_original>
// kernel: tpu_custom_call.1
$region0: #{tpu_custom_call.1}
  #allocation0 [shape = 'u32[]', space=smem, size = 0x4, offset = 0x4, fixed_abs, tag = 'smem constant byte address 0x4 - core index']
  #allocation1 [shape = 'u32[144,128]{1,0:T(1,128)}', space=vmem, size = 0x12000, scoped, tag = 'internal scratch']
  #allocation2 [shape = 'f32[1]{0:T(128)S(6)}', space=smem, size = 0x200, scoped, tag = 'scoped memory for tpu_custom_call.1']
  %s0 = inlined_call_operand.vmem [shape: f32[1024,32], index: 0, kind: input, shape index: {}]
  %s1 = inlined_call_operand.vmem [shape: f32[32,32], index: 1, kind: input, shape index: {}]
  %s2 = inlined_call_operand.vmem [shape: f32[1,32], index: 2, kind: input, shape index: {}]
  %s3 = inlined_call_operand.vmem [shape: f32[1,32], index: 3, kind: input, shape index: {}]
  %s4 = inlined_call_operand.<no memory space> [shape: f32[1], index: 4, kind: input, shape index: {}]
  %s5 = inlined_call_operand.vmem [shape: f32[1024,1], index: 5, kind: output, shape index: {}]
  %s6 = sld [smem:[#allocation0]]
  $region30: #{tpu_custom_call.1} parent=0
    _
  %s8 = ssub.s32 1, %s6
  %s9 = scalar_select 0, %s8, %s6
  %10 = sst [smem:[#allocation2]] %s4
  // Predicated region
  $region2: #{tpu_custom_call.1} parent=0 // pred_check
    _
  $region3: #{tpu_custom_call.1} parent=0 // pred_check_branch
    %12 = sbr.rel (0) target = $region5
  $region4: #{tpu_custom_call.1} parent=0 // pred_region
    _
  $region5: #{tpu_custom_call.1} parent=0 // pred_fallthru
    _
  // Predicated region
  $region6: #{tpu_custom_call.1} parent=0 // pred_check
    _
  $region7: #{tpu_custom_call.1} parent=0 // pred_check_branch
    %14 = sbr.rel (0) target = $region9
  $region8: #{tpu_custom_call.1} parent=0 // pred_region
    _
  $region9: #{tpu_custom_call.1} parent=0 // pred_fallthru
    _
  // Predicated region
  $region10: #{tpu_custom_call.1} parent=0 // pred_check
    _
  $region11: #{tpu_custom_call.1} parent=0 // pred_check_branch
    %16 = sbr.rel (0) target = $region13
  $region12: #{tpu_custom_call.1} parent=0 // pred_region
    _
  $region13: #{tpu_custom_call.1} parent=0 // pred_fallthru
    _
  // Predicated region
  $region14: #{tpu_custom_call.1} parent=0 // pred_check
    _
  $region15: #{tpu_custom_call.1} parent=0 // pred_check_branch
    %18 = sbr.rel (0) target = $region17
  $region16: #{tpu_custom_call.1} parent=0 // pred_region
    _
  $region17: #{tpu_custom_call.1} parent=0 // pred_fallthru
    _
  // Predicated region
  $region18: #{tpu_custom_call.1} parent=0 // pred_check
    _
  $region19: #{tpu_custom_call.1} parent=0 // pred_check_branch
    %20 = sbr.rel (0) target = $region21
  $region20: #{tpu_custom_call.1} parent=0 // pred_region
    _
  $region21: #{tpu_custom_call.1} parent=0 // pred_fallthru
    _
  %v21 = vld [vmem:[%s0] sm:$0xff]
  %v22 = vld [vmem:[%s0 + $0x8] sm:$0xff]
  %v23 = vld [vmem:[%s0 + $0x10] sm:$0xff]
  %v24 = vld [vmem:[%s0 + $0x18] sm:$0xff]
  %v25 = vld [vmem:[%s0 + $0x20] sm:$0xff]
  %v26 = vld [vmem:[%s0 + $0x28] sm:$0xff]
  %v27 = vld [vmem:[%s0 + $0x30] sm:$0xff]
  %v28 = vld [vmem:[%s0 + $0x38] sm:$0xff]
  %v29 = vld [vmem:[%s0 + $0x40] sm:$0xff]
  %v30 = vld [vmem:[%s0 + $0x48] sm:$0xff]
  %v31 = vld [vmem:[%s0 + $0x50] sm:$0xff]
  %v32 = vld [vmem:[%s0 + $0x58] sm:$0xff]
  %v33 = vld [vmem:[%s0 + $0x60] sm:$0xff]
  %v34 = vld [vmem:[%s0 + $0x68] sm:$0xff]
  %v35 = vld [vmem:[%s0 + $0x70] sm:$0xff]
  %v36 = vld [vmem:[%s0 + $0x78] sm:$0xff]
  %v37 = vld [vmem:[%s0 + $0x80] sm:$0xff]
  %v38 = vld [vmem:[%s0 + $0x88] sm:$0xff]
  %v39 = vld [vmem:[%s0 + $0x90] sm:$0xff]
  %v40 = vld [vmem:[%s0 + $0x98] sm:$0xff]
  %v41 = vld [vmem:[%s0 + $0xa0] sm:$0xff]
  %v42 = vld [vmem:[%s0 + $0xa8] sm:$0xff]
  %v43 = vld [vmem:[%s0 + $0xb0] sm:$0xff]
  %v44 = vld [vmem:[%s0 + $0xb8] sm:$0xff]
  %v45 = vld [vmem:[%s0 + $0xc0] sm:$0xff]
  %v46 = vld [vmem:[%s0 + $0xc8] sm:$0xff]
  %v47 = vld [vmem:[%s0 + $0xd0] sm:$0xff]
  %v48 = vld [vmem:[%s0 + $0xd8] sm:$0xff]
  %v49 = vld [vmem:[%s0 + $0xe0] sm:$0xff]
  %v50 = vld [vmem:[%s0 + $0xe8] sm:$0xff]
  %v51 = vld [vmem:[%s0 + $0xf0] sm:$0xff]
  %v52 = vld [vmem:[%s0 + $0xf8] sm:$0xff]
  %v53 = vld [vmem:[%s0 + $0x100] sm:$0xff]
  %v54 = vld [vmem:[%s0 + $0x108] sm:$0xff]
  %v55 = vld [vmem:[%s0 + $0x110] sm:$0xff]
  %v56 = vld [vmem:[%s0 + $0x118] sm:$0xff]
  %v57 = vld [vmem:[%s0 + $0x120] sm:$0xff]
  %v58 = vld [vmem:[%s0 + $0x128] sm:$0xff]
  %v59 = vld [vmem:[%s0 + $0x130] sm:$0xff]
  %v60 = vld [vmem:[%s0 + $0x138] sm:$0xff]
  %v61 = vld [vmem:[%s0 + $0x140] sm:$0xff]
  %v62 = vld [vmem:[%s0 + $0x148] sm:$0xff]
  %v63 = vld [vmem:[%s0 + $0x150] sm:$0xff]
  %v64 = vld [vmem:[%s0 + $0x158] sm:$0xff]
  %v65 = vld [vmem:[%s0 + $0x160] sm:$0xff]
  %v66 = vld [vmem:[%s0 + $0x168] sm:$0xff]
  %v67 = vld [vmem:[%s0 + $0x170] sm:$0xff]
  %v68 = vld [vmem:[%s0 + $0x178] sm:$0xff]
  %v69 = vld [vmem:[%s0 + $0x180] sm:$0xff]
  %v70 = vld [vmem:[%s0 + $0x188] sm:$0xff]
  %v71 = vld [vmem:[%s0 + $0x190] sm:$0xff]
  %v72 = vld [vmem:[%s0 + $0x198] sm:$0xff]
  %v73 = vld [vmem:[%s0 + $0x1a0] sm:$0xff]
  %v74 = vld [vmem:[%s0 + $0x1a8] sm:$0xff]
  %v75 = vld [vmem:[%s0 + $0x1b0] sm:$0xff]
  %v76 = vld [vmem:[%s0 + $0x1b8] sm:$0xff]
  %v77 = vld [vmem:[%s0 + $0x1c0] sm:$0xff]
  %v78 = vld [vmem:[%s0 + $0x1c8] sm:$0xff]
  %v79 = vld [vmem:[%s0 + $0x1d0] sm:$0xff]
  %v80 = vld [vmem:[%s0 + $0x1d8] sm:$0xff]
  %v81 = vld [vmem:[%s0 + $0x1e0] sm:$0xff]
  %v82 = vld [vmem:[%s0 + $0x1e8] sm:$0xff]
  %v83 = vld [vmem:[%s0 + $0x1f0] sm:$0xff]
  %v84 = vld [vmem:[%s0 + $0x1f8] sm:$0xff]
  %v85 = vld [vmem:[%s0 + $0x200] sm:$0xff]
  %v86 = vld [vmem:[%s0 + $0x208] sm:$0xff]
  %v87 = vld [vmem:[%s0 + $0x210] sm:$0xff]
  %v88 = vld [vmem:[%s0 + $0x218] sm:$0xff]
  %v89 = vld [vmem:[%s0 + $0x220] sm:$0xff]
  %v90 = vld [vmem:[%s0 + $0x228] sm:$0xff]
  %v91 = vld [vmem:[%s0 + $0x230] sm:$0xff]
  %v92 = vld [vmem:[%s0 + $0x238] sm:$0xff]
  %v93 = vld [vmem:[%s0 + $0x240] sm:$0xff]
  %v94 = vld [vmem:[%s0 + $0x248] sm:$0xff]
  %v95 = vld [vmem:[%s0 + $0x250] sm:$0xff]
  %v96 = vld [vmem:[%s0 + $0x258] sm:$0xff]
  %v97 = vld [vmem:[%s0 + $0x260] sm:$0xff]
  %v98 = vld [vmem:[%s0 + $0x268] sm:$0xff]
  %v99 = vld [vmem:[%s0 + $0x270] sm:$0xff]
  %v100 = vld [vmem:[%s0 + $0x278] sm:$0xff]
  %v101 = vld [vmem:[%s0 + $0x280] sm:$0xff]
  %v102 = vld [vmem:[%s0 + $0x288] sm:$0xff]
  %v103 = vld [vmem:[%s0 + $0x290] sm:$0xff]
  %v104 = vld [vmem:[%s0 + $0x298] sm:$0xff]
  %v105 = vld [vmem:[%s0 + $0x2a0] sm:$0xff]
  %v106 = vld [vmem:[%s0 + $0x2a8] sm:$0xff]
  %v107 = vld [vmem:[%s0 + $0x2b0] sm:$0xff]
  %v108 = vld [vmem:[%s0 + $0x2b8] sm:$0xff]
  %v109 = vld [vmem:[%s0 + $0x2c0] sm:$0xff]
  %v110 = vld [vmem:[%s0 + $0x2c8] sm:$0xff]
  %v111 = vld [vmem:[%s0 + $0x2d0] sm:$0xff]
  %v112 = vld [vmem:[%s0 + $0x2d8] sm:$0xff]
  %v113 = vld [vmem:[%s0 + $0x2e0] sm:$0xff]
  %v114 = vld [vmem:[%s0 + $0x2e8] sm:$0xff]
  %v115 = vld [vmem:[%s0 + $0x2f0] sm:$0xff]
  %v116 = vld [vmem:[%s0 + $0x2f8] sm:$0xff]
  %v117 = vld [vmem:[%s0 + $0x300] sm:$0xff]
  %v118 = vld [vmem:[%s0 + $0x308] sm:$0xff]
  %v119 = vld [vmem:[%s0 + $0x310] sm:$0xff]
  %v120 = vld [vmem:[%s0 + $0x318] sm:$0xff]
  %v121 = vld [vmem:[%s0 + $0x320] sm:$0xff]
  %v122 = vld [vmem:[%s0 + $0x328] sm:$0xff]
  %v123 = vld [vmem:[%s0 + $0x330] sm:$0xff]
  %v124 = vld [vmem:[%s0 + $0x338] sm:$0xff]
  %v125 = vld [vmem:[%s0 + $0x340] sm:$0xff]
  %v126 = vld [vmem:[%s0 + $0x348] sm:$0xff]
  %v127 = vld [vmem:[%s0 + $0x350] sm:$0xff]
  %v128 = vld [vmem:[%s0 + $0x358] sm:$0xff]
  %v129 = vld [vmem:[%s0 + $0x360] sm:$0xff]
  %v130 = vld [vmem:[%s0 + $0x368] sm:$0xff]
  %v131 = vld [vmem:[%s0 + $0x370] sm:$0xff]
  %v132 = vld [vmem:[%s0 + $0x378] sm:$0xff]
  %v133 = vld [vmem:[%s0 + $0x380] sm:$0xff]
  %v134 = vld [vmem:[%s0 + $0x388] sm:$0xff]
  %v135 = vld [vmem:[%s0 + $0x390] sm:$0xff]
  %v136 = vld [vmem:[%s0 + $0x398] sm:$0xff]
  %v137 = vld [vmem:[%s0 + $0x3a0] sm:$0xff]
  %v138 = vld [vmem:[%s0 + $0x3a8] sm:$0xff]
  %v139 = vld [vmem:[%s0 + $0x3b0] sm:$0xff]
  %v140 = vld [vmem:[%s0 + $0x3b8] sm:$0xff]
  %v141 = vld [vmem:[%s0 + $0x3c0] sm:$0xff]
  %v142 = vld [vmem:[%s0 + $0x3c8] sm:$0xff]
  %v143 = vld [vmem:[%s0 + $0x3d0] sm:$0xff]
  %v144 = vld [vmem:[%s0 + $0x3d8] sm:$0xff]
  %v145 = vld [vmem:[%s0 + $0x3e0] sm:$0xff]
  %v146 = vld [vmem:[%s0 + $0x3e8] sm:$0xff]
  %v147 = vld [vmem:[%s0 + $0x3f0] sm:$0xff]
  %v148 = vld [vmem:[%s0 + $0x3f8] sm:$0xff]
  %v149 = vld [vmem:[%s1] sm:$0xff]
  %v150 = vld [vmem:[%s1 + $0x8] sm:$0xff]
  %v151 = vld [vmem:[%s1 + $0x10] sm:$0xff]
  %v152 = vld [vmem:[%s1 + $0x18] sm:$0xff]
  %v153 = vld [vmem:[%s2] sm:$0x1]
  %v155 = vlaneseq
  %v156 = vshrl.u32 %v155, 7
  %v157 = vsub.s32 0, %v156
  %v158 = vrot.slane %v153, %v157
  %vm160 = vcmask 261120
  %v162 = vsel %vm160, %v21, 0
  %v165 = vsel %vm160, %v22, 0
  %v168 = vsel %vm160, %v23, 0
  %v171 = vsel %vm160, %v24, 0
  %v174 = vsel %vm160, %v25, 0
  %v177 = vsel %vm160, %v26, 0
  %v180 = vsel %vm160, %v27, 0
  %v183 = vsel %vm160, %v28, 0
  %v186 = vsel %vm160, %v29, 0
  %v189 = vsel %vm160, %v30, 0
  %v192 = vsel %vm160, %v31, 0
  %v195 = vsel %vm160, %v32, 0
  %v198 = vsel %vm160, %v33, 0
  %v201 = vsel %vm160, %v34, 0
  %v204 = vsel %vm160, %v35, 0
  %v207 = vsel %vm160, %v36, 0
  %v210 = vsel %vm160, %v37, 0
  %v213 = vsel %vm160, %v38, 0
  %v216 = vsel %vm160, %v39, 0
  %v219 = vsel %vm160, %v40, 0
  %v222 = vsel %vm160, %v41, 0
  %v225 = vsel %vm160, %v42, 0
  %v228 = vsel %vm160, %v43, 0
  %v231 = vsel %vm160, %v44, 0
  %v234 = vsel %vm160, %v45, 0
  %v237 = vsel %vm160, %v46, 0
  %v240 = vsel %vm160, %v47, 0
  %v243 = vsel %vm160, %v48, 0
  %v246 = vsel %vm160, %v49, 0
  %v249 = vsel %vm160, %v50, 0
  %v252 = vsel %vm160, %v51, 0
  %v255 = vsel %vm160, %v52, 0
  %v258 = vsel %vm160, %v53, 0
  %v261 = vsel %vm160, %v54, 0
  %v264 = vsel %vm160, %v55, 0
  %v267 = vsel %vm160, %v56, 0
  %v270 = vsel %vm160, %v57, 0
  %v273 = vsel %vm160, %v58, 0
  %v276 = vsel %vm160, %v59, 0
  %v279 = vsel %vm160, %v60, 0
  %v282 = vsel %vm160, %v61, 0
  %v285 = vsel %vm160, %v62, 0
  %v288 = vsel %vm160, %v63, 0
  %v291 = vsel %vm160, %v64, 0
  %v294 = vsel %vm160, %v65, 0
  %v297 = vsel %vm160, %v66, 0
  %v300 = vsel %vm160, %v67, 0
  %v303 = vsel %vm160, %v68, 0
  %v306 = vsel %vm160, %v69, 0
  %v309 = vsel %vm160, %v70, 0
  %v312 = vsel %vm160, %v71, 0
  %v315 = vsel %vm160, %v72, 0
  %v318 = vsel %vm160, %v73, 0
  %v321 = vsel %vm160, %v74, 0
  %v324 = vsel %vm160, %v75, 0
  %v327 = vsel %vm160, %v76, 0
  %v330 = vsel %vm160, %v77, 0
  %v333 = vsel %vm160, %v78, 0
  %v336 = vsel %vm160, %v79, 0
  %v339 = vsel %vm160, %v80, 0
  %v342 = vsel %vm160, %v81, 0
  %v345 = vsel %vm160, %v82, 0
  %v348 = vsel %vm160, %v83, 0
  %v351 = vsel %vm160, %v84, 0
  %v354 = vsel %vm160, %v85, 0
  %v357 = vsel %vm160, %v86, 0
  %v360 = vsel %vm160, %v87, 0
  %v363 = vsel %vm160, %v88, 0
  %v366 = vsel %vm160, %v89, 0
  %v369 = vsel %vm160, %v90, 0
  %v372 = vsel %vm160, %v91, 0
  %v375 = vsel %vm160, %v92, 0
  %v378 = vsel %vm160, %v93, 0
  %v381 = vsel %vm160, %v94, 0
  %v384 = vsel %vm160, %v95, 0
  %v387 = vsel %vm160, %v96, 0
  %v390 = vsel %vm160, %v97, 0
  %v393 = vsel %vm160, %v98, 0
  %v396 = vsel %vm160, %v99, 0
  %v399 = vsel %vm160, %v100, 0
  %v402 = vsel %vm160, %v101, 0
  %v405 = vsel %vm160, %v102, 0
  %v408 = vsel %vm160, %v103, 0
  %v411 = vsel %vm160, %v104, 0
  %v414 = vsel %vm160, %v105, 0
  %v417 = vsel %vm160, %v106, 0
  %v420 = vsel %vm160, %v107, 0
  %v423 = vsel %vm160, %v108, 0
  %v426 = vsel %vm160, %v109, 0
  %v429 = vsel %vm160, %v110, 0
  %v432 = vsel %vm160, %v111, 0
  %v435 = vsel %vm160, %v112, 0
  %v438 = vsel %vm160, %v113, 0
  %v441 = vsel %vm160, %v114, 0
  %v444 = vsel %vm160, %v115, 0
  %v447 = vsel %vm160, %v116, 0
  %v450 = vsel %vm160, %v117, 0
  %v453 = vsel %vm160, %v118, 0
  %v456 = vsel %vm160, %v119, 0
  %v459 = vsel %vm160, %v120, 0
  %v462 = vsel %vm160, %v121, 0
  %v465 = vsel %vm160, %v122, 0
  %v468 = vsel %vm160, %v123, 0
  %v471 = vsel %vm160, %v124, 0
  %v474 = vsel %vm160, %v125, 0
  %v477 = vsel %vm160, %v126, 0
  %v480 = vsel %vm160, %v127, 0
  %v483 = vsel %vm160, %v128, 0
  %v486 = vsel %vm160, %v129, 0
  %v489 = vsel %vm160, %v130, 0
  %v492 = vsel %vm160, %v131, 0
  %v495 = vsel %vm160, %v132, 0
  %v498 = vsel %vm160, %v133, 0
  %v501 = vsel %vm160, %v134, 0
  %v504 = vsel %vm160, %v135, 0
  %v507 = vsel %vm160, %v136, 0
  %v510 = vsel %vm160, %v137, 0
  %v513 = vsel %vm160, %v138, 0
  %v516 = vsel %vm160, %v139, 0
  %v519 = vsel %vm160, %v140, 0
  %v522 = vsel %vm160, %v141, 0
  %v525 = vsel %vm160, %v142, 0
  %v528 = vsel %vm160, %v143, 0
  %v531 = vsel %vm160, %v144, 0
  %v534 = vsel %vm160, %v145, 0
  %v537 = vsel %vm160, %v146, 0
  %v540 = vsel %vm160, %v147, 0
  %v543 = vsel %vm160, %v148, 0
  %545 = vmatprep.subr.mxu0 0.0
  %546 = vmatpush1.msra.mxu0 0.0
  %547 = vmatprep.subr.mxu0 0.0
  %548 = vmatpush1.msra.mxu0 0.0
  %549 = vmatprep.subr.mxu0 0.0
  %550 = vmatpush1.msra.mxu0 0.0
  %551 = vmatprep.subr.mxu0 0.0
  %552 = vmatpush1.msra.mxu0 0.0
  %553 = vmatprep.subr.mxu0 0.0
  %554 = vmatpush1.msra.mxu0 0.0
  %555 = vmatprep.subr.mxu0 0.0
  %556 = vmatpush1.msra.mxu0 0.0
  %557 = vmatprep.subr.mxu0 0.0
  %558 = vmatpush1.msra.mxu0 0.0
  %559 = vmatprep.subr.mxu0 0.0
  %560 = vmatpush1.msra.mxu0 0.0
  %561 = vmatprep.subr.mxu0 0.0
  %562 = vmatpush1.msra.mxu0 0.0
  %563 = vmatprep.subr.mxu0 0.0
  %564 = vmatpush1.msra.mxu0 0.0
  %565 = vmatprep.subr.mxu0 0.0
  %566 = vmatpush1.msra.mxu0 0.0
  %567 = vmatprep.subr.mxu0 0.0
  %568 = vmatpush1.msra.mxu0 0.0
  %569 = vmatprep.subr.mxu0 0.0
  %570 = vmatpush1.msra.mxu0 %v152
  %571 = vmatprep.subr.mxu0 0.0
  %572 = vmatpush1.msra.mxu0 %v151
  %573 = vmatprep.subr.mxu0 0.0
  %574 = vmatpush1.msra.mxu0 %v150
  %575 = vmatprep.subr.mxu0 0.0
  %576 = vmatpush1.msra.mxu0 %v149
  %577 = vmatprep.subr.mxu0 0.0
  %578 = vmatpush2.msra.mxu0 0.0
  %579 = vmatprep.subr.mxu0 0.0
  %580 = vmatpush2.msra.mxu0 0.0
  %581 = vmatprep.subr.mxu0 0.0
  %582 = vmatpush2.msra.mxu0 0.0
  %583 = vmatprep.subr.mxu0 0.0
  %584 = vmatpush2.msra.mxu0 0.0
  %585 = vmatprep.subr.mxu0 0.0
  %586 = vmatpush2.msra.mxu0 0.0
  %587 = vmatprep.subr.mxu0 0.0
  %588 = vmatpush2.msra.mxu0 0.0
  %589 = vmatprep.subr.mxu0 0.0
  %590 = vmatpush2.msra.mxu0 0.0
  %591 = vmatprep.subr.mxu0 0.0
  %592 = vmatpush2.msra.mxu0 0.0
  %593 = vmatprep.subr.mxu0 0.0
  %594 = vmatpush2.msra.mxu0 0.0
  %595 = vmatprep.subr.mxu0 0.0
  %596 = vmatpush2.msra.mxu0 0.0
  %597 = vmatprep.subr.mxu0 0.0
  %598 = vmatpush2.msra.mxu0 0.0
  %599 = vmatprep.subr.mxu0 0.0
  %600 = vmatpush2.msra.mxu0 0.0
  %601 = vmatprep.subr.mxu0 0.0
  %602 = vmatpush2.msra.mxu0 0.0
  %603 = vmatprep.subr.mxu0 0.0
  %604 = vmatpush2.msra.mxu0 0.0
  %605 = vmatprep.subr.mxu0 0.0
  %606 = vmatpush2.msra.mxu0 0.0
  %607 = vmatprep.subr.mxu0 0.0
  %608 = vmatpush2.msra.mxu0 0.0
  %609 = vmatprep.mubr.f32.mxu0 0.0
  %610 = vmatmul.mubr.f32.gmra.mxu0 %v162
  %v611 = vpop.f32.mrf.mxu0
  %v612 = vadd.f32 %v158, %v611
  %v613 = vpop.f32.mrf.mxu0
  %614 = vmatprep.mubr.f32.mxu0 0.0
  %615 = vmatmul.mubr.f32.gmra.mxu0 %v165
  %v616 = vpop.f32.mrf.mxu0
  %v617 = vadd.f32 %v158, %v616
  %v618 = vpop.f32.mrf.mxu0
  %619 = vmatprep.mubr.f32.mxu0 0.0
  %620 = vmatmul.mubr.f32.gmra.mxu0 %v168
  %v621 = vpop.f32.mrf.mxu0
  %v622 = vadd.f32 %v158, %v621
  %v623 = vpop.f32.mrf.mxu0
  %624 = vmatprep.mubr.f32.mxu0 0.0
  %625 = vmatmul.mubr.f32.gmra.mxu0 %v171
  %v626 = vpop.f32.mrf.mxu0
  %v627 = vadd.f32 %v158, %v626
  %v628 = vpop.f32.mrf.mxu0
  %629 = vmatprep.mubr.f32.mxu0 0.0
  %630 = vmatmul.mubr.f32.gmra.mxu0 %v174
  %v631 = vpop.f32.mrf.mxu0
  %v632 = vadd.f32 %v158, %v631
  %v633 = vpop.f32.mrf.mxu0
  %634 = vmatprep.mubr.f32.mxu0 0.0
  %635 = vmatmul.mubr.f32.gmra.mxu0 %v177
  %v636 = vpop.f32.mrf.mxu0
  %v637 = vadd.f32 %v158, %v636
  %v638 = vpop.f32.mrf.mxu0
  %639 = vmatprep.mubr.f32.mxu0 0.0
  %640 = vmatmul.mubr.f32.gmra.mxu0 %v180
  %v641 = vpop.f32.mrf.mxu0
  %v642 = vadd.f32 %v158, %v641
  %v643 = vpop.f32.mrf.mxu0
  %644 = vmatprep.mubr.f32.mxu0 0.0
  %645 = vmatmul.mubr.f32.gmra.mxu0 %v183
  %v646 = vpop.f32.mrf.mxu0
  %v647 = vadd.f32 %v158, %v646
  %v648 = vpop.f32.mrf.mxu0
  %649 = vmatprep.mubr.f32.mxu0 0.0
  %650 = vmatmul.mubr.f32.gmra.mxu0 %v186
  %v651 = vpop.f32.mrf.mxu0
  %v652 = vadd.f32 %v158, %v651
  %v653 = vpop.f32.mrf.mxu0
  %654 = vmatprep.mubr.f32.mxu0 0.0
  %655 = vmatmul.mubr.f32.gmra.mxu0 %v189
  %v656 = vpop.f32.mrf.mxu0
  %v657 = vadd.f32 %v158, %v656
  %v658 = vpop.f32.mrf.mxu0
  %659 = vmatprep.mubr.f32.mxu0 0.0
  %660 = vmatmul.mubr.f32.gmra.mxu0 %v192
  %v661 = vpop.f32.mrf.mxu0
  %v662 = vadd.f32 %v158, %v661
  %v663 = vpop.f32.mrf.mxu0
  %664 = vmatprep.mubr.f32.mxu0 0.0
  %665 = vmatmul.mubr.f32.gmra.mxu0 %v195
  %v666 = vpop.f32.mrf.mxu0
  %v667 = vadd.f32 %v158, %v666
  %v668 = vpop.f32.mrf.mxu0
  %669 = vmatprep.mubr.f32.mxu0 0.0
  %670 = vmatmul.mubr.f32.gmra.mxu0 %v198
  %v671 = vpop.f32.mrf.mxu0
  %v672 = vadd.f32 %v158, %v671
  %v673 = vpop.f32.mrf.mxu0
  %674 = vmatprep.mubr.f32.mxu0 0.0
  %675 = vmatmul.mubr.f32.gmra.mxu0 %v201
  %v676 = vpop.f32.mrf.mxu0
  %v677 = vadd.f32 %v158, %v676
  %v678 = vpop.f32.mrf.mxu0
  %679 = vmatprep.mubr.f32.mxu0 0.0
  %680 = vmatmul.mubr.f32.gmra.mxu0 %v204
  %v681 = vpop.f32.mrf.mxu0
  %v682 = vadd.f32 %v158, %v681
  %v683 = vpop.f32.mrf.mxu0
  %684 = vmatprep.mubr.f32.mxu0 0.0
  %685 = vmatmul.mubr.f32.gmra.mxu0 %v207
  %v686 = vpop.f32.mrf.mxu0
  %v687 = vadd.f32 %v158, %v686
  %v688 = vpop.f32.mrf.mxu0
  %689 = vmatprep.mubr.f32.mxu0 0.0
  %690 = vmatmul.mubr.f32.gmra.mxu0 %v210
  %v691 = vpop.f32.mrf.mxu0
  %v692 = vadd.f32 %v158, %v691
  %v693 = vpop.f32.mrf.mxu0
  %694 = vmatprep.mubr.f32.mxu0 0.0
  %695 = vmatmul.mubr.f32.gmra.mxu0 %v213
  %v696 = vpop.f32.mrf.mxu0
  %v697 = vadd.f32 %v158, %v696
  %v698 = vpop.f32.mrf.mxu0
  %699 = vmatprep.mubr.f32.mxu0 0.0
  %700 = vmatmul.mubr.f32.gmra.mxu0 %v216
  %v701 = vpop.f32.mrf.mxu0
  %v702 = vadd.f32 %v158, %v701
  %v703 = vpop.f32.mrf.mxu0
  %704 = vmatprep.mubr.f32.mxu0 0.0
  %705 = vmatmul.mubr.f32.gmra.mxu0 %v219
  %v706 = vpop.f32.mrf.mxu0
  %v707 = vadd.f32 %v158, %v706
  %v708 = vpop.f32.mrf.mxu0
  %709 = vmatprep.mubr.f32.mxu0 0.0
  %710 = vmatmul.mubr.f32.gmra.mxu0 %v222
  %v711 = vpop.f32.mrf.mxu0
  %v712 = vadd.f32 %v158, %v711
  %v713 = vpop.f32.mrf.mxu0
  %714 = vmatprep.mubr.f32.mxu0 0.0
  %715 = vmatmul.mubr.f32.gmra.mxu0 %v225
  %v716 = vpop.f32.mrf.mxu0
  %v717 = vadd.f32 %v158, %v716
  %v718 = vpop.f32.mrf.mxu0
  %719 = vmatprep.mubr.f32.mxu0 0.0
  %720 = vmatmul.mubr.f32.gmra.mxu0 %v228
  %v721 = vpop.f32.mrf.mxu0
  %v722 = vadd.f32 %v158, %v721
  %v723 = vpop.f32.mrf.mxu0
  %724 = vmatprep.mubr.f32.mxu0 0.0
  %725 = vmatmul.mubr.f32.gmra.mxu0 %v231
  %v726 = vpop.f32.mrf.mxu0
  %v727 = vadd.f32 %v158, %v726
  %v728 = vpop.f32.mrf.mxu0
  %729 = vmatprep.mubr.f32.mxu0 0.0
  %730 = vmatmul.mubr.f32.gmra.mxu0 %v234
  %v731 = vpop.f32.mrf.mxu0
  %v732 = vadd.f32 %v158, %v731
  %v733 = vpop.f32.mrf.mxu0
  %734 = vmatprep.mubr.f32.mxu0 0.0
  %735 = vmatmul.mubr.f32.gmra.mxu0 %v237
  %v736 = vpop.f32.mrf.mxu0
  %v737 = vadd.f32 %v158, %v736
  %v738 = vpop.f32.mrf.mxu0
  %739 = vmatprep.mubr.f32.mxu0 0.0
  %740 = vmatmul.mubr.f32.gmra.mxu0 %v240
  %v741 = vpop.f32.mrf.mxu0
  %v742 = vadd.f32 %v158, %v741
  %v743 = vpop.f32.mrf.mxu0
  %744 = vmatprep.mubr.f32.mxu0 0.0
  %745 = vmatmul.mubr.f32.gmra.mxu0 %v243
  %v746 = vpop.f32.mrf.mxu0
  %v747 = vadd.f32 %v158, %v746
  %v748 = vpop.f32.mrf.mxu0
  %749 = vmatprep.mubr.f32.mxu0 0.0
  %750 = vmatmul.mubr.f32.gmra.mxu0 %v246
  %v751 = vpop.f32.mrf.mxu0
  %v752 = vadd.f32 %v158, %v751
  %v753 = vpop.f32.mrf.mxu0
  %754 = vmatprep.mubr.f32.mxu0 0.0
  %755 = vmatmul.mubr.f32.gmra.mxu0 %v249
  %v756 = vpop.f32.mrf.mxu0
  %v757 = vadd.f32 %v158, %v756
  %v758 = vpop.f32.mrf.mxu0
  %759 = vmatprep.mubr.f32.mxu0 0.0
  %760 = vmatmul.mubr.f32.gmra.mxu0 %v252
  %v761 = vpop.f32.mrf.mxu0
  %v762 = vadd.f32 %v158, %v761
  %v763 = vpop.f32.mrf.mxu0
  %764 = vmatprep.mubr.f32.mxu0 0.0
  %765 = vmatmul.mubr.f32.gmra.mxu0 %v255
  %v766 = vpop.f32.mrf.mxu0
  %v767 = vadd.f32 %v158, %v766
  %v768 = vpop.f32.mrf.mxu0
  %769 = vmatprep.mubr.f32.mxu0 0.0
  %770 = vmatmul.mubr.f32.gmra.mxu0 %v258
  %v771 = vpop.f32.mrf.mxu0
  %v772 = vadd.f32 %v158, %v771
  %v773 = vpop.f32.mrf.mxu0
  %774 = vmatprep.mubr.f32.mxu0 0.0
  %775 = vmatmul.mubr.f32.gmra.mxu0 %v261
  %v776 = vpop.f32.mrf.mxu0
  %v777 = vadd.f32 %v158, %v776
  %v778 = vpop.f32.mrf.mxu0
  %779 = vmatprep.mubr.f32.mxu0 0.0
  %780 = vmatmul.mubr.f32.gmra.mxu0 %v264
  %v781 = vpop.f32.mrf.mxu0
  %v782 = vadd.f32 %v158, %v781
  %v783 = vpop.f32.mrf.mxu0
  %784 = vmatprep.mubr.f32.mxu0 0.0
  %785 = vmatmul.mubr.f32.gmra.mxu0 %v267
  %v786 = vpop.f32.mrf.mxu0
  %v787 = vadd.f32 %v158, %v786
  %v788 = vpop.f32.mrf.mxu0
  %789 = vmatprep.mubr.f32.mxu0 0.0
  %790 = vmatmul.mubr.f32.gmra.mxu0 %v270
  %v791 = vpop.f32.mrf.mxu0
  %v792 = vadd.f32 %v158, %v791
  %v793 = vpop.f32.mrf.mxu0
  %794 = vmatprep.mubr.f32.mxu0 0.0
  %795 = vmatmul.mubr.f32.gmra.mxu0 %v273
  %v796 = vpop.f32.mrf.mxu0
  %v797 = vadd.f32 %v158, %v796
  %v798 = vpop.f32.mrf.mxu0
  %799 = vmatprep.mubr.f32.mxu0 0.0
  %800 = vmatmul.mubr.f32.gmra.mxu0 %v276
  %v801 = vpop.f32.mrf.mxu0
  %v802 = vadd.f32 %v158, %v801
  %v803 = vpop.f32.mrf.mxu0
  %804 = vmatprep.mubr.f32.mxu0 0.0
  %805 = vmatmul.mubr.f32.gmra.mxu0 %v279
  %v806 = vpop.f32.mrf.mxu0
  %v807 = vadd.f32 %v158, %v806
  %v808 = vpop.f32.mrf.mxu0
  %809 = vmatprep.mubr.f32.mxu0 0.0
  %810 = vmatmul.mubr.f32.gmra.mxu0 %v282
  %v811 = vpop.f32.mrf.mxu0
  %v812 = vadd.f32 %v158, %v811
  %v813 = vpop.f32.mrf.mxu0
  %814 = vmatprep.mubr.f32.mxu0 0.0
  %815 = vmatmul.mubr.f32.gmra.mxu0 %v285
  %v816 = vpop.f32.mrf.mxu0
  %v817 = vadd.f32 %v158, %v816
  %v818 = vpop.f32.mrf.mxu0
  %819 = vmatprep.mubr.f32.mxu0 0.0
  %820 = vmatmul.mubr.f32.gmra.mxu0 %v288
  %v821 = vpop.f32.mrf.mxu0
  %v822 = vadd.f32 %v158, %v821
  %v823 = vpop.f32.mrf.mxu0
  %824 = vmatprep.mubr.f32.mxu0 0.0
  %825 = vmatmul.mubr.f32.gmra.mxu0 %v291
  %v826 = vpop.f32.mrf.mxu0
  %v827 = vadd.f32 %v158, %v826
  %v828 = vpop.f32.mrf.mxu0
  %829 = vmatprep.mubr.f32.mxu0 0.0
  %830 = vmatmul.mubr.f32.gmra.mxu0 %v294
  %v831 = vpop.f32.mrf.mxu0
  %v832 = vadd.f32 %v158, %v831
  %v833 = vpop.f32.mrf.mxu0
  %834 = vmatprep.mubr.f32.mxu0 0.0
  %835 = vmatmul.mubr.f32.gmra.mxu0 %v297
  %v836 = vpop.f32.mrf.mxu0
  %v837 = vadd.f32 %v158, %v836
  %v838 = vpop.f32.mrf.mxu0
  %839 = vmatprep.mubr.f32.mxu0 0.0
  %840 = vmatmul.mubr.f32.gmra.mxu0 %v300
  %v841 = vpop.f32.mrf.mxu0
  %v842 = vadd.f32 %v158, %v841
  %v843 = vpop.f32.mrf.mxu0
  %844 = vmatprep.mubr.f32.mxu0 0.0
  %845 = vmatmul.mubr.f32.gmra.mxu0 %v303
  %v846 = vpop.f32.mrf.mxu0
  %v847 = vadd.f32 %v158, %v846
  %v848 = vpop.f32.mrf.mxu0
  %849 = vmatprep.mubr.f32.mxu0 0.0
  %850 = vmatmul.mubr.f32.gmra.mxu0 %v306
  %v851 = vpop.f32.mrf.mxu0
  %v852 = vadd.f32 %v158, %v851
  %v853 = vpop.f32.mrf.mxu0
  %854 = vmatprep.mubr.f32.mxu0 0.0
  %855 = vmatmul.mubr.f32.gmra.mxu0 %v309
  %v856 = vpop.f32.mrf.mxu0
  %v857 = vadd.f32 %v158, %v856
  %v858 = vpop.f32.mrf.mxu0
  %859 = vmatprep.mubr.f32.mxu0 0.0
  %860 = vmatmul.mubr.f32.gmra.mxu0 %v312
  %v861 = vpop.f32.mrf.mxu0
  %v862 = vadd.f32 %v158, %v861
  %v863 = vpop.f32.mrf.mxu0
  %864 = vmatprep.mubr.f32.mxu0 0.0
  %865 = vmatmul.mubr.f32.gmra.mxu0 %v315
  %v866 = vpop.f32.mrf.mxu0
  %v867 = vadd.f32 %v158, %v866
  %v868 = vpop.f32.mrf.mxu0
  %869 = vmatprep.mubr.f32.mxu0 0.0
  %870 = vmatmul.mubr.f32.gmra.mxu0 %v318
  %v871 = vpop.f32.mrf.mxu0
  %v872 = vadd.f32 %v158, %v871
  %v873 = vpop.f32.mrf.mxu0
  %874 = vmatprep.mubr.f32.mxu0 0.0
  %875 = vmatmul.mubr.f32.gmra.mxu0 %v321
  %v876 = vpop.f32.mrf.mxu0
  %v877 = vadd.f32 %v158, %v876
  %v878 = vpop.f32.mrf.mxu0
  %879 = vmatprep.mubr.f32.mxu0 0.0
  %880 = vmatmul.mubr.f32.gmra.mxu0 %v324
  %v881 = vpop.f32.mrf.mxu0
  %v882 = vadd.f32 %v158, %v881
  %v883 = vpop.f32.mrf.mxu0
  %884 = vmatprep.mubr.f32.mxu0 0.0
  %885 = vmatmul.mubr.f32.gmra.mxu0 %v327
  %v886 = vpop.f32.mrf.mxu0
  %v887 = vadd.f32 %v158, %v886
  %v888 = vpop.f32.mrf.mxu0
  %889 = vmatprep.mubr.f32.mxu0 0.0
  %890 = vmatmul.mubr.f32.gmra.mxu0 %v330
  %v891 = vpop.f32.mrf.mxu0
  %v892 = vadd.f32 %v158, %v891
  %v893 = vpop.f32.mrf.mxu0
  %894 = vmatprep.mubr.f32.mxu0 0.0
  %895 = vmatmul.mubr.f32.gmra.mxu0 %v333
  %v896 = vpop.f32.mrf.mxu0
  %v897 = vadd.f32 %v158, %v896
  %v898 = vpop.f32.mrf.mxu0
  %899 = vmatprep.mubr.f32.mxu0 0.0
  %900 = vmatmul.mubr.f32.gmra.mxu0 %v336
  %v901 = vpop.f32.mrf.mxu0
  %v902 = vadd.f32 %v158, %v901
  %v903 = vpop.f32.mrf.mxu0
  %904 = vmatprep.mubr.f32.mxu0 0.0
  %905 = vmatmul.mubr.f32.gmra.mxu0 %v339
  %v906 = vpop.f32.mrf.mxu0
  %v907 = vadd.f32 %v158, %v906
  %v908 = vpop.f32.mrf.mxu0
  %909 = vmatprep.mubr.f32.mxu0 0.0
  %910 = vmatmul.mubr.f32.gmra.mxu0 %v342
  %v911 = vpop.f32.mrf.mxu0
  %v912 = vadd.f32 %v158, %v911
  %v913 = vpop.f32.mrf.mxu0
  %914 = vmatprep.mubr.f32.mxu0 0.0
  %915 = vmatmul.mubr.f32.gmra.mxu0 %v345
  %v916 = vpop.f32.mrf.mxu0
  %v917 = vadd.f32 %v158, %v916
  %v918 = vpop.f32.mrf.mxu0
  %919 = vmatprep.mubr.f32.mxu0 0.0
  %920 = vmatmul.mubr.f32.gmra.mxu0 %v348
  %v921 = vpop.f32.mrf.mxu0
  %v922 = vadd.f32 %v158, %v921
  %v923 = vpop.f32.mrf.mxu0
  %924 = vmatprep.mubr.f32.mxu0 0.0
  %925 = vmatmul.mubr.f32.gmra.mxu0 %v351
  %v926 = vpop.f32.mrf.mxu0
  %v927 = vadd.f32 %v158, %v926
  %v928 = vpop.f32.mrf.mxu0
  %929 = vmatprep.mubr.f32.mxu0 0.0
  %930 = vmatmul.mubr.f32.gmra.mxu0 %v354
  %v931 = vpop.f32.mrf.mxu0
  %v932 = vadd.f32 %v158, %v931
  %v933 = vpop.f32.mrf.mxu0
  %934 = vmatprep.mubr.f32.mxu0 0.0
  %935 = vmatmul.mubr.f32.gmra.mxu0 %v357
  %v936 = vpop.f32.mrf.mxu0
  %v937 = vadd.f32 %v158, %v936
  %v938 = vpop.f32.mrf.mxu0
  %939 = vmatprep.mubr.f32.mxu0 0.0
  %940 = vmatmul.mubr.f32.gmra.mxu0 %v360
  %v941 = vpop.f32.mrf.mxu0
  %v942 = vadd.f32 %v158, %v941
  %v943 = vpop.f32.mrf.mxu0
  %944 = vmatprep.mubr.f32.mxu0 0.0
  %945 = vmatmul.mubr.f32.gmra.mxu0 %v363
  %v946 = vpop.f32.mrf.mxu0
  %v947 = vadd.f32 %v158, %v946
  %v948 = vpop.f32.mrf.mxu0
  %949 = vmatprep.mubr.f32.mxu0 0.0
  %950 = vmatmul.mubr.f32.gmra.mxu0 %v366
  %v951 = vpop.f32.mrf.mxu0
  %v952 = vadd.f32 %v158, %v951
  %v953 = vpop.f32.mrf.mxu0
  %954 = vmatprep.mubr.f32.mxu0 0.0
  %955 = vmatmul.mubr.f32.gmra.mxu0 %v369
  %v956 = vpop.f32.mrf.mxu0
  %v957 = vadd.f32 %v158, %v956
  %v958 = vpop.f32.mrf.mxu0
  %959 = vmatprep.mubr.f32.mxu0 0.0
  %960 = vmatmul.mubr.f32.gmra.mxu0 %v372
  %v961 = vpop.f32.mrf.mxu0
  %v962 = vadd.f32 %v158, %v961
  %v963 = vpop.f32.mrf.mxu0
  %964 = vmatprep.mubr.f32.mxu0 0.0
  %965 = vmatmul.mubr.f32.gmra.mxu0 %v375
  %v966 = vpop.f32.mrf.mxu0
  %v967 = vadd.f32 %v158, %v966
  %v968 = vpop.f32.mrf.mxu0
  %969 = vmatprep.mubr.f32.mxu0 0.0
  %970 = vmatmul.mubr.f32.gmra.mxu0 %v378
  %v971 = vpop.f32.mrf.mxu0
  %v972 = vadd.f32 %v158, %v971
  %v973 = vpop.f32.mrf.mxu0
  %974 = vmatprep.mubr.f32.mxu0 0.0
  %975 = vmatmul.mubr.f32.gmra.mxu0 %v381
  %v976 = vpop.f32.mrf.mxu0
  %v977 = vadd.f32 %v158, %v976
  %v978 = vpop.f32.mrf.mxu0
  %979 = vmatprep.mubr.f32.mxu0 0.0
  %980 = vmatmul.mubr.f32.gmra.mxu0 %v384
  %v981 = vpop.f32.mrf.mxu0
  %v982 = vadd.f32 %v158, %v981
  %v983 = vpop.f32.mrf.mxu0
  %984 = vmatprep.mubr.f32.mxu0 0.0
  %985 = vmatmul.mubr.f32.gmra.mxu0 %v387
  %v986 = vpop.f32.mrf.mxu0
  %v987 = vadd.f32 %v158, %v986
  %v988 = vpop.f32.mrf.mxu0
  %989 = vmatprep.mubr.f32.mxu0 0.0
  %990 = vmatmul.mubr.f32.gmra.mxu0 %v390
  %v991 = vpop.f32.mrf.mxu0
  %v992 = vadd.f32 %v158, %v991
  %v993 = vpop.f32.mrf.mxu0
  %994 = vmatprep.mubr.f32.mxu0 0.0
  %995 = vmatmul.mubr.f32.gmra.mxu0 %v393
  %v996 = vpop.f32.mrf.mxu0
  %v997 = vadd.f32 %v158, %v996
  %v998 = vpop.f32.mrf.mxu0
  %999 = vmatprep.mubr.f32.mxu0 0.0
  %1000 = vmatmul.mubr.f32.gmra.mxu0 %v396
  %v1001 = vpop.f32.mrf.mxu0
  %v1002 = vadd.f32 %v158, %v1001
  %v1003 = vpop.f32.mrf.mxu0
  %1004 = vmatprep.mubr.f32.mxu0 0.0
  %1005 = vmatmul.mubr.f32.gmra.mxu0 %v399
  %v1006 = vpop.f32.mrf.mxu0
  %v1007 = vadd.f32 %v158, %v1006
  %v1008 = vpop.f32.mrf.mxu0
  %1009 = vmatprep.mubr.f32.mxu0 0.0
  %1010 = vmatmul.mubr.f32.gmra.mxu0 %v402
  %v1011 = vpop.f32.mrf.mxu0
  %v1012 = vadd.f32 %v158, %v1011
  %v1013 = vpop.f32.mrf.mxu0
  %1014 = vmatprep.mubr.f32.mxu0 0.0
  %1015 = vmatmul.mubr.f32.gmra.mxu0 %v405
  %v1016 = vpop.f32.mrf.mxu0
  %v1017 = vadd.f32 %v158, %v1016
  %v1018 = vpop.f32.mrf.mxu0
  %1019 = vmatprep.mubr.f32.mxu0 0.0
  %1020 = vmatmul.mubr.f32.gmra.mxu0 %v408
  %v1021 = vpop.f32.mrf.mxu0
  %v1022 = vadd.f32 %v158, %v1021
  %v1023 = vpop.f32.mrf.mxu0
  %1024 = vmatprep.mubr.f32.mxu0 0.0
  %1025 = vmatmul.mubr.f32.gmra.mxu0 %v411
  %v1026 = vpop.f32.mrf.mxu0
  %v1027 = vadd.f32 %v158, %v1026
  %v1028 = vpop.f32.mrf.mxu0
  %1029 = vmatprep.mubr.f32.mxu0 0.0
  %1030 = vmatmul.mubr.f32.gmra.mxu0 %v414
  %v1031 = vpop.f32.mrf.mxu0
  %v1032 = vadd.f32 %v158, %v1031
  %v1033 = vpop.f32.mrf.mxu0
  %1034 = vmatprep.mubr.f32.mxu0 0.0
  %1035 = vmatmul.mubr.f32.gmra.mxu0 %v417
  %v1036 = vpop.f32.mrf.mxu0
  %v1037 = vadd.f32 %v158, %v1036
  %v1038 = vpop.f32.mrf.mxu0
  %1039 = vmatprep.mubr.f32.mxu0 0.0
  %1040 = vmatmul.mubr.f32.gmra.mxu0 %v420
  %v1041 = vpop.f32.mrf.mxu0
  %v1042 = vadd.f32 %v158, %v1041
  %v1043 = vpop.f32.mrf.mxu0
  %1044 = vmatprep.mubr.f32.mxu0 0.0
  %1045 = vmatmul.mubr.f32.gmra.mxu0 %v423
  %v1046 = vpop.f32.mrf.mxu0
  %v1047 = vadd.f32 %v158, %v1046
  %v1048 = vpop.f32.mrf.mxu0
  %1049 = vmatprep.mubr.f32.mxu0 0.0
  %1050 = vmatmul.mubr.f32.gmra.mxu0 %v426
  %v1051 = vpop.f32.mrf.mxu0
  %v1052 = vadd.f32 %v158, %v1051
  %v1053 = vpop.f32.mrf.mxu0
  %1054 = vmatprep.mubr.f32.mxu0 0.0
  %1055 = vmatmul.mubr.f32.gmra.mxu0 %v429
  %v1056 = vpop.f32.mrf.mxu0
  %v1057 = vadd.f32 %v158, %v1056
  %v1058 = vpop.f32.mrf.mxu0
  %1059 = vmatprep.mubr.f32.mxu0 0.0
  %1060 = vmatmul.mubr.f32.gmra.mxu0 %v432
  %v1061 = vpop.f32.mrf.mxu0
  %v1062 = vadd.f32 %v158, %v1061
  %v1063 = vpop.f32.mrf.mxu0
  %1064 = vmatprep.mubr.f32.mxu0 0.0
  %1065 = vmatmul.mubr.f32.gmra.mxu0 %v435
  %v1066 = vpop.f32.mrf.mxu0
  %v1067 = vadd.f32 %v158, %v1066
  %v1068 = vpop.f32.mrf.mxu0
  %1069 = vmatprep.mubr.f32.mxu0 0.0
  %1070 = vmatmul.mubr.f32.gmra.mxu0 %v438
  %v1071 = vpop.f32.mrf.mxu0
  %v1072 = vadd.f32 %v158, %v1071
  %v1073 = vpop.f32.mrf.mxu0
  %1074 = vmatprep.mubr.f32.mxu0 0.0
  %1075 = vmatmul.mubr.f32.gmra.mxu0 %v441
  %v1076 = vpop.f32.mrf.mxu0
  %v1077 = vadd.f32 %v158, %v1076
  %v1078 = vpop.f32.mrf.mxu0
  %1079 = vmatprep.mubr.f32.mxu0 0.0
  %1080 = vmatmul.mubr.f32.gmra.mxu0 %v444
  %v1081 = vpop.f32.mrf.mxu0
  %v1082 = vadd.f32 %v158, %v1081
  %v1083 = vpop.f32.mrf.mxu0
  %1084 = vmatprep.mubr.f32.mxu0 0.0
  %1085 = vmatmul.mubr.f32.gmra.mxu0 %v447
  %v1086 = vpop.f32.mrf.mxu0
  %v1087 = vadd.f32 %v158, %v1086
  %v1088 = vpop.f32.mrf.mxu0
  %1089 = vmatprep.mubr.f32.mxu0 0.0
  %1090 = vmatmul.mubr.f32.gmra.mxu0 %v450
  %v1091 = vpop.f32.mrf.mxu0
  %v1092 = vadd.f32 %v158, %v1091
  %v1093 = vpop.f32.mrf.mxu0
  %1094 = vmatprep.mubr.f32.mxu0 0.0
  %1095 = vmatmul.mubr.f32.gmra.mxu0 %v453
  %v1096 = vpop.f32.mrf.mxu0
  %v1097 = vadd.f32 %v158, %v1096
  %v1098 = vpop.f32.mrf.mxu0
  %1099 = vmatprep.mubr.f32.mxu0 0.0
  %1100 = vmatmul.mubr.f32.gmra.mxu0 %v456
  %v1101 = vpop.f32.mrf.mxu0
  %v1102 = vadd.f32 %v158, %v1101
  %v1103 = vpop.f32.mrf.mxu0
  %1104 = vmatprep.mubr.f32.mxu0 0.0
  %1105 = vmatmul.mubr.f32.gmra.mxu0 %v459
  %v1106 = vpop.f32.mrf.mxu0
  %v1107 = vadd.f32 %v158, %v1106
  %v1108 = vpop.f32.mrf.mxu0
  %1109 = vmatprep.mubr.f32.mxu0 0.0
  %1110 = vmatmul.mubr.f32.gmra.mxu0 %v462
  %v1111 = vpop.f32.mrf.mxu0
  %v1112 = vadd.f32 %v158, %v1111
  %v1113 = vpop.f32.mrf.mxu0
  %1114 = vmatprep.mubr.f32.mxu0 0.0
  %1115 = vmatmul.mubr.f32.gmra.mxu0 %v465
  %v1116 = vpop.f32.mrf.mxu0
  %v1117 = vadd.f32 %v158, %v1116
  %v1118 = vpop.f32.mrf.mxu0
  %1119 = vmatprep.mubr.f32.mxu0 0.0
  %1120 = vmatmul.mubr.f32.gmra.mxu0 %v468
  %v1121 = vpop.f32.mrf.mxu0
  %v1122 = vadd.f32 %v158, %v1121
  %v1123 = vpop.f32.mrf.mxu0
  %1124 = vmatprep.mubr.f32.mxu0 0.0
  %1125 = vmatmul.mubr.f32.gmra.mxu0 %v471
  %v1126 = vpop.f32.mrf.mxu0
  %v1127 = vadd.f32 %v158, %v1126
  %v1128 = vpop.f32.mrf.mxu0
  %1129 = vmatprep.mubr.f32.mxu0 0.0
  %1130 = vmatmul.mubr.f32.gmra.mxu0 %v474
  %v1131 = vpop.f32.mrf.mxu0
  %v1132 = vadd.f32 %v158, %v1131
  %v1133 = vpop.f32.mrf.mxu0
  %1134 = vmatprep.mubr.f32.mxu0 0.0
  %1135 = vmatmul.mubr.f32.gmra.mxu0 %v477
  %v1136 = vpop.f32.mrf.mxu0
  %v1137 = vadd.f32 %v158, %v1136
  %v1138 = vpop.f32.mrf.mxu0
  %1139 = vmatprep.mubr.f32.mxu0 0.0
  %1140 = vmatmul.mubr.f32.gmra.mxu0 %v480
  %v1141 = vpop.f32.mrf.mxu0
  %v1142 = vadd.f32 %v158, %v1141
  %v1143 = vpop.f32.mrf.mxu0
  %1144 = vmatprep.mubr.f32.mxu0 0.0
  %1145 = vmatmul.mubr.f32.gmra.mxu0 %v483
  %v1146 = vpop.f32.mrf.mxu0
  %v1147 = vadd.f32 %v158, %v1146
  %v1148 = vpop.f32.mrf.mxu0
  %1149 = vmatprep.mubr.f32.mxu0 0.0
  %1150 = vmatmul.mubr.f32.gmra.mxu0 %v486
  %v1151 = vpop.f32.mrf.mxu0
  %v1152 = vadd.f32 %v158, %v1151
  %v1153 = vpop.f32.mrf.mxu0
  %1154 = vmatprep.mubr.f32.mxu0 0.0
  %1155 = vmatmul.mubr.f32.gmra.mxu0 %v489
  %v1156 = vpop.f32.mrf.mxu0
  %v1157 = vadd.f32 %v158, %v1156
  %v1158 = vpop.f32.mrf.mxu0
  %1159 = vmatprep.mubr.f32.mxu0 0.0
  %1160 = vmatmul.mubr.f32.gmra.mxu0 %v492
  %v1161 = vpop.f32.mrf.mxu0
  %v1162 = vadd.f32 %v158, %v1161
  %v1163 = vpop.f32.mrf.mxu0
  %1164 = vmatprep.mubr.f32.mxu0 0.0
  %1165 = vmatmul.mubr.f32.gmra.mxu0 %v495
  %v1166 = vpop.f32.mrf.mxu0
  %v1167 = vadd.f32 %v158, %v1166
  %v1168 = vpop.f32.mrf.mxu0
  %1169 = vmatprep.mubr.f32.mxu0 0.0
  %1170 = vmatmul.mubr.f32.gmra.mxu0 %v498
  %v1171 = vpop.f32.mrf.mxu0
  %v1172 = vadd.f32 %v158, %v1171
  %v1173 = vpop.f32.mrf.mxu0
  %1174 = vmatprep.mubr.f32.mxu0 0.0
  %1175 = vmatmul.mubr.f32.gmra.mxu0 %v501
  %v1176 = vpop.f32.mrf.mxu0
  %v1177 = vadd.f32 %v158, %v1176
  %v1178 = vpop.f32.mrf.mxu0
  %1179 = vmatprep.mubr.f32.mxu0 0.0
  %1180 = vmatmul.mubr.f32.gmra.mxu0 %v504
  %v1181 = vpop.f32.mrf.mxu0
  %v1182 = vadd.f32 %v158, %v1181
  %v1183 = vpop.f32.mrf.mxu0
  %1184 = vmatprep.mubr.f32.mxu0 0.0
  %1185 = vmatmul.mubr.f32.gmra.mxu0 %v507
  %v1186 = vpop.f32.mrf.mxu0
  %v1187 = vadd.f32 %v158, %v1186
  %v1188 = vpop.f32.mrf.mxu0
  %1189 = vmatprep.mubr.f32.mxu0 0.0
  %1190 = vmatmul.mubr.f32.gmra.mxu0 %v510
  %v1191 = vpop.f32.mrf.mxu0
  %v1192 = vadd.f32 %v158, %v1191
  %v1193 = vpop.f32.mrf.mxu0
  %1194 = vmatprep.mubr.f32.mxu0 0.0
  %1195 = vmatmul.mubr.f32.gmra.mxu0 %v513
  %v1196 = vpop.f32.mrf.mxu0
  %v1197 = vadd.f32 %v158, %v1196
  %v1198 = vpop.f32.mrf.mxu0
  %1199 = vmatprep.mubr.f32.mxu0 0.0
  %1200 = vmatmul.mubr.f32.gmra.mxu0 %v516
  %v1201 = vpop.f32.mrf.mxu0
  %v1202 = vadd.f32 %v158, %v1201
  %v1203 = vpop.f32.mrf.mxu0
  %1204 = vmatprep.mubr.f32.mxu0 0.0
  %1205 = vmatmul.mubr.f32.gmra.mxu0 %v519
  %v1206 = vpop.f32.mrf.mxu0
  %v1207 = vadd.f32 %v158, %v1206
  %v1208 = vpop.f32.mrf.mxu0
  %1209 = vmatprep.mubr.f32.mxu0 0.0
  %1210 = vmatmul.mubr.f32.gmra.mxu0 %v522
  %v1211 = vpop.f32.mrf.mxu0
  %v1212 = vadd.f32 %v158, %v1211
  %v1213 = vpop.f32.mrf.mxu0
  %1214 = vmatprep.mubr.f32.mxu0 0.0
  %1215 = vmatmul.mubr.f32.gmra.mxu0 %v525
  %v1216 = vpop.f32.mrf.mxu0
  %v1217 = vadd.f32 %v158, %v1216
  %v1218 = vpop.f32.mrf.mxu0
  %1219 = vmatprep.mubr.f32.mxu0 0.0
  %1220 = vmatmul.mubr.f32.gmra.mxu0 %v528
  %v1221 = vpop.f32.mrf.mxu0
  %v1222 = vadd.f32 %v158, %v1221
  %v1223 = vpop.f32.mrf.mxu0
  %1224 = vmatprep.mubr.f32.mxu0 0.0
  %1225 = vmatmul.mubr.f32.gmra.mxu0 %v531
  %v1226 = vpop.f32.mrf.mxu0
  %v1227 = vadd.f32 %v158, %v1226
  %v1228 = vpop.f32.mrf.mxu0
  %1229 = vmatprep.mubr.f32.mxu0 0.0
  %1230 = vmatmul.mubr.f32.gmra.mxu0 %v534
  %v1231 = vpop.f32.mrf.mxu0
  %v1232 = vadd.f32 %v158, %v1231
  %v1233 = vpop.f32.mrf.mxu0
  %1234 = vmatprep.mubr.f32.mxu0 0.0
  %1235 = vmatmul.mubr.f32.gmra.mxu0 %v537
  %v1236 = vpop.f32.mrf.mxu0
  %v1237 = vadd.f32 %v158, %v1236
  %v1238 = vpop.f32.mrf.mxu0
  %1239 = vmatprep.mubr.f32.mxu0 0.0
  %1240 = vmatmul.mubr.f32.gmra.mxu0 %v540
  %v1241 = vpop.f32.mrf.mxu0
  %v1242 = vadd.f32 %v158, %v1241
  %v1243 = vpop.f32.mrf.mxu0
  %1244 = vmatprep.mubr.f32.mxu0 0.0
  %1245 = vmatmul.mubr.f32.gmra.mxu0 %v543
  %v1246 = vpop.f32.mrf.mxu0
  %v1247 = vadd.f32 %v158, %v1246
  %v1248 = vpop.f32.mrf.mxu0
  %1249 = vdwg.mxu0
  %v1250 = vmax.f32 %v612, 0.0
  %v1251 = vmax.f32 %v617, 0.0
  %v1252 = vmax.f32 %v622, 0.0
  %v1253 = vmax.f32 %v627, 0.0
  %v1254 = vmax.f32 %v632, 0.0
  %v1255 = vmax.f32 %v637, 0.0
  %v1256 = vmax.f32 %v642, 0.0
  %v1257 = vmax.f32 %v647, 0.0
  %v1258 = vmax.f32 %v652, 0.0
  %v1259 = vmax.f32 %v657, 0.0
  %v1260 = vmax.f32 %v662, 0.0
  %v1261 = vmax.f32 %v667, 0.0
  %v1262 = vmax.f32 %v672, 0.0
  %v1263 = vmax.f32 %v677, 0.0
  %v1264 = vmax.f32 %v682, 0.0
  %v1265 = vmax.f32 %v687, 0.0
  %v1266 = vmax.f32 %v692, 0.0
  %v1267 = vmax.f32 %v697, 0.0
  %v1268 = vmax.f32 %v702, 0.0
  %v1269 = vmax.f32 %v707, 0.0
  %v1270 = vmax.f32 %v712, 0.0
  %v1271 = vmax.f32 %v717, 0.0
  %v1272 = vmax.f32 %v722, 0.0
  %v1273 = vmax.f32 %v727, 0.0
  %v1274 = vmax.f32 %v732, 0.0
  %v1275 = vmax.f32 %v737, 0.0
  %v1276 = vmax.f32 %v742, 0.0
  %v1277 = vmax.f32 %v747, 0.0
  %v1278 = vmax.f32 %v752, 0.0
  %v1279 = vmax.f32 %v757, 0.0
  %v1280 = vmax.f32 %v762, 0.0
  %v1281 = vmax.f32 %v767, 0.0
  %v1282 = vmax.f32 %v772, 0.0
  %v1283 = vmax.f32 %v777, 0.0
  %v1284 = vmax.f32 %v782, 0.0
  %v1285 = vmax.f32 %v787, 0.0
  %v1286 = vmax.f32 %v792, 0.0
  %v1287 = vmax.f32 %v797, 0.0
  %v1288 = vmax.f32 %v802, 0.0
  %v1289 = vmax.f32 %v807, 0.0
  %v1290 = vmax.f32 %v812, 0.0
  %v1291 = vmax.f32 %v817, 0.0
  %v1292 = vmax.f32 %v822, 0.0
  %v1293 = vmax.f32 %v827, 0.0
  %v1294 = vmax.f32 %v832, 0.0
  %v1295 = vmax.f32 %v837, 0.0
  %v1296 = vmax.f32 %v842, 0.0
  %v1297 = vmax.f32 %v847, 0.0
  %v1298 = vmax.f32 %v852, 0.0
  %v1299 = vmax.f32 %v857, 0.0
  %v1300 = vmax.f32 %v862, 0.0
  %v1301 = vmax.f32 %v867, 0.0
  %v1302 = vmax.f32 %v872, 0.0
  %v1303 = vmax.f32 %v877, 0.0
  %v1304 = vmax.f32 %v882, 0.0
  %v1305 = vmax.f32 %v887, 0.0
  %v1306 = vmax.f32 %v892, 0.0
  %v1307 = vmax.f32 %v897, 0.0
  %v1308 = vmax.f32 %v902, 0.0
  %v1309 = vmax.f32 %v907, 0.0
  %v1310 = vmax.f32 %v912, 0.0
  %v1311 = vmax.f32 %v917, 0.0
  %v1312 = vmax.f32 %v922, 0.0
  %v1313 = vmax.f32 %v927, 0.0
  %v1314 = vmax.f32 %v932, 0.0
  %v1315 = vmax.f32 %v937, 0.0
  %v1316 = vmax.f32 %v942, 0.0
  %v1317 = vmax.f32 %v947, 0.0
  %v1318 = vmax.f32 %v952, 0.0
  %v1319 = vmax.f32 %v957, 0.0
  %v1320 = vmax.f32 %v962, 0.0
  %v1321 = vmax.f32 %v967, 0.0
  %v1322 = vmax.f32 %v972, 0.0
  %v1323 = vmax.f32 %v977, 0.0
  %v1324 = vmax.f32 %v982, 0.0
  %v1325 = vmax.f32 %v987, 0.0
  %v1326 = vmax.f32 %v992, 0.0
  %v1327 = vmax.f32 %v997, 0.0
  %v1328 = vmax.f32 %v1002, 0.0
  %v1329 = vmax.f32 %v1007, 0.0
  %v1330 = vmax.f32 %v1012, 0.0
  %v1331 = vmax.f32 %v1017, 0.0
  %v1332 = vmax.f32 %v1022, 0.0
  %v1333 = vmax.f32 %v1027, 0.0
  %v1334 = vmax.f32 %v1032, 0.0
  %v1335 = vmax.f32 %v1037, 0.0
  %v1336 = vmax.f32 %v1042, 0.0
  %v1337 = vmax.f32 %v1047, 0.0
  %v1338 = vmax.f32 %v1052, 0.0
  %v1339 = vmax.f32 %v1057, 0.0
  %v1340 = vmax.f32 %v1062, 0.0
  %v1341 = vmax.f32 %v1067, 0.0
  %v1342 = vmax.f32 %v1072, 0.0
  %v1343 = vmax.f32 %v1077, 0.0
  %v1344 = vmax.f32 %v1082, 0.0
  %v1345 = vmax.f32 %v1087, 0.0
  %v1346 = vmax.f32 %v1092, 0.0
  %v1347 = vmax.f32 %v1097, 0.0
  %v1348 = vmax.f32 %v1102, 0.0
  %v1349 = vmax.f32 %v1107, 0.0
  %v1350 = vmax.f32 %v1112, 0.0
  %v1351 = vmax.f32 %v1117, 0.0
  %v1352 = vmax.f32 %v1122, 0.0
  %v1353 = vmax.f32 %v1127, 0.0
  %v1354 = vmax.f32 %v1132, 0.0
  %v1355 = vmax.f32 %v1137, 0.0
  %v1356 = vmax.f32 %v1142, 0.0
  %v1357 = vmax.f32 %v1147, 0.0
  %v1358 = vmax.f32 %v1152, 0.0
  %v1359 = vmax.f32 %v1157, 0.0
  %v1360 = vmax.f32 %v1162, 0.0
  %v1361 = vmax.f32 %v1167, 0.0
  %v1362 = vmax.f32 %v1172, 0.0
  %v1363 = vmax.f32 %v1177, 0.0
  %v1364 = vmax.f32 %v1182, 0.0
  %v1365 = vmax.f32 %v1187, 0.0
  %v1366 = vmax.f32 %v1192, 0.0
  %v1367 = vmax.f32 %v1197, 0.0
  %v1368 = vmax.f32 %v1202, 0.0
  %v1369 = vmax.f32 %v1207, 0.0
  %v1370 = vmax.f32 %v1212, 0.0
  %v1371 = vmax.f32 %v1217, 0.0
  %v1372 = vmax.f32 %v1222, 0.0
  %v1373 = vmax.f32 %v1227, 0.0
  %v1374 = vmax.f32 %v1232, 0.0
  %v1375 = vmax.f32 %v1237, 0.0
  %v1376 = vmax.f32 %v1242, 0.0
  %v1377 = vmax.f32 %v1247, 0.0
  %v1378 = vld [vmem:[%s3] sm:$0x1]
  %v1380 = vlaneseq
  %v1381 = vshrl.u32 %v1380, 7
  %v1382 = vsub.s32 0, %v1381
  %v1383 = vrot.slane %v1378, %v1382
  %v1385 = vmul.f32 %v1250, %v1383
  %v1386 = vmul.f32 %v1251, %v1383
  %v1387 = vmul.f32 %v1252, %v1383
  %v1388 = vmul.f32 %v1253, %v1383
  %v1389 = vmul.f32 %v1254, %v1383
  %v1390 = vmul.f32 %v1255, %v1383
  %v1391 = vmul.f32 %v1256, %v1383
  %v1392 = vmul.f32 %v1257, %v1383
  %v1393 = vmul.f32 %v1258, %v1383
  %v1394 = vmul.f32 %v1259, %v1383
  %v1395 = vmul.f32 %v1260, %v1383
  %v1396 = vmul.f32 %v1261, %v1383
  %v1397 = vmul.f32 %v1262, %v1383
  %v1398 = vmul.f32 %v1263, %v1383
  %v1399 = vmul.f32 %v1264, %v1383
  %v1400 = vmul.f32 %v1265, %v1383
  %v1401 = vmul.f32 %v1266, %v1383
  %v1402 = vmul.f32 %v1267, %v1383
  %v1403 = vmul.f32 %v1268, %v1383
  %v1404 = vmul.f32 %v1269, %v1383
  %v1405 = vmul.f32 %v1270, %v1383
  %v1406 = vmul.f32 %v1271, %v1383
  %v1407 = vmul.f32 %v1272, %v1383
  %v1408 = vmul.f32 %v1273, %v1383
  %v1409 = vmul.f32 %v1274, %v1383
  %v1410 = vmul.f32 %v1275, %v1383
  %v1411 = vmul.f32 %v1276, %v1383
  %v1412 = vmul.f32 %v1277, %v1383
  %v1413 = vmul.f32 %v1278, %v1383
  %v1414 = vmul.f32 %v1279, %v1383
  %v1415 = vmul.f32 %v1280, %v1383
  %v1416 = vmul.f32 %v1281, %v1383
  %v1417 = vmul.f32 %v1282, %v1383
  %v1418 = vmul.f32 %v1283, %v1383
  %v1419 = vmul.f32 %v1284, %v1383
  %v1420 = vmul.f32 %v1285, %v1383
  %v1421 = vmul.f32 %v1286, %v1383
  %v1422 = vmul.f32 %v1287, %v1383
  %v1423 = vmul.f32 %v1288, %v1383
  %v1424 = vmul.f32 %v1289, %v1383
  %v1425 = vmul.f32 %v1290, %v1383
  %v1426 = vmul.f32 %v1291, %v1383
  %v1427 = vmul.f32 %v1292, %v1383
  %v1428 = vmul.f32 %v1293, %v1383
  %v1429 = vmul.f32 %v1294, %v1383
  %v1430 = vmul.f32 %v1295, %v1383
  %v1431 = vmul.f32 %v1296, %v1383
  %v1432 = vmul.f32 %v1297, %v1383
  %v1433 = vmul.f32 %v1298, %v1383
  %v1434 = vmul.f32 %v1299, %v1383
  %v1435 = vmul.f32 %v1300, %v1383
  %v1436 = vmul.f32 %v1301, %v1383
  %v1437 = vmul.f32 %v1302, %v1383
  %v1438 = vmul.f32 %v1303, %v1383
  %v1439 = vmul.f32 %v1304, %v1383
  %v1440 = vmul.f32 %v1305, %v1383
  %v1441 = vmul.f32 %v1306, %v1383
  %v1442 = vmul.f32 %v1307, %v1383
  %v1443 = vmul.f32 %v1308, %v1383
  %v1444 = vmul.f32 %v1309, %v1383
  %v1445 = vmul.f32 %v1310, %v1383
  %v1446 = vmul.f32 %v1311, %v1383
  %v1447 = vmul.f32 %v1312, %v1383
  %v1448 = vmul.f32 %v1313, %v1383
  %v1449 = vmul.f32 %v1314, %v1383
  %v1450 = vmul.f32 %v1315, %v1383
  %v1451 = vmul.f32 %v1316, %v1383
  %v1452 = vmul.f32 %v1317, %v1383
  %v1453 = vmul.f32 %v1318, %v1383
  %v1454 = vmul.f32 %v1319, %v1383
  %v1455 = vmul.f32 %v1320, %v1383
  %v1456 = vmul.f32 %v1321, %v1383
  %v1457 = vmul.f32 %v1322, %v1383
  %v1458 = vmul.f32 %v1323, %v1383
  %v1459 = vmul.f32 %v1324, %v1383
  %v1460 = vmul.f32 %v1325, %v1383
  %v1461 = vmul.f32 %v1326, %v1383
  %v1462 = vmul.f32 %v1327, %v1383
  %v1463 = vmul.f32 %v1328, %v1383
  %v1464 = vmul.f32 %v1329, %v1383
  %v1465 = vmul.f32 %v1330, %v1383
  %v1466 = vmul.f32 %v1331, %v1383
  %v1467 = vmul.f32 %v1332, %v1383
  %v1468 = vmul.f32 %v1333, %v1383
  %v1469 = vmul.f32 %v1334, %v1383
  %v1470 = vmul.f32 %v1335, %v1383
  %v1471 = vmul.f32 %v1336, %v1383
  %v1472 = vmul.f32 %v1337, %v1383
  %v1473 = vmul.f32 %v1338, %v1383
  %v1474 = vmul.f32 %v1339, %v1383
  %v1475 = vmul.f32 %v1340, %v1383
  %v1476 = vmul.f32 %v1341, %v1383
  %v1477 = vmul.f32 %v1342, %v1383
  %v1478 = vmul.f32 %v1343, %v1383
  %v1479 = vmul.f32 %v1344, %v1383
  %v1480 = vmul.f32 %v1345, %v1383
  %v1481 = vmul.f32 %v1346, %v1383
  %v1482 = vmul.f32 %v1347, %v1383
  %v1483 = vmul.f32 %v1348, %v1383
  %v1484 = vmul.f32 %v1349, %v1383
  %v1485 = vmul.f32 %v1350, %v1383
  %v1486 = vmul.f32 %v1351, %v1383
  %v1487 = vmul.f32 %v1352, %v1383
  %v1488 = vmul.f32 %v1353, %v1383
  %v1489 = vmul.f32 %v1354, %v1383
  %v1490 = vmul.f32 %v1355, %v1383
  %v1491 = vmul.f32 %v1356, %v1383
  %v1492 = vmul.f32 %v1357, %v1383
  %v1493 = vmul.f32 %v1358, %v1383
  %v1494 = vmul.f32 %v1359, %v1383
  %v1495 = vmul.f32 %v1360, %v1383
  %v1496 = vmul.f32 %v1361, %v1383
  %v1497 = vmul.f32 %v1362, %v1383
  %v1498 = vmul.f32 %v1363, %v1383
  %v1499 = vmul.f32 %v1364, %v1383
  %v1500 = vmul.f32 %v1365, %v1383
  %v1501 = vmul.f32 %v1366, %v1383
  %v1502 = vmul.f32 %v1367, %v1383
  %v1503 = vmul.f32 %v1368, %v1383
  %v1504 = vmul.f32 %v1369, %v1383
  %v1505 = vmul.f32 %v1370, %v1383
  %v1506 = vmul.f32 %v1371, %v1383
  %v1507 = vmul.f32 %v1372, %v1383
  %v1508 = vmul.f32 %v1373, %v1383
  %v1509 = vmul.f32 %v1374, %v1383
  %v1510 = vmul.f32 %v1375, %v1383
  %v1511 = vmul.f32 %v1376, %v1383
  %v1512 = vmul.f32 %v1377, %v1383
  %v1513 = vsel %vm160, %v1385, 0.0
  %1514 = vadd.xlane.f32.xlu0 %v1513
  %v1515 = vpop.xlane.xlu0 %1514
  %v1516 = vsel %vm160, %v1386, 0.0
  %1517 = vadd.xlane.f32.xlu0 %v1516
  %v1518 = vpop.xlane.xlu0 %1517
  %v1519 = vsel %vm160, %v1387, 0.0
  %1520 = vadd.xlane.f32.xlu0 %v1519
  %v1521 = vpop.xlane.xlu0 %1520
  %v1522 = vsel %vm160, %v1388, 0.0
  %1523 = vadd.xlane.f32.xlu0 %v1522
  %v1524 = vpop.xlane.xlu0 %1523
  %v1525 = vsel %vm160, %v1389, 0.0
  %1526 = vadd.xlane.f32.xlu0 %v1525
  %v1527 = vpop.xlane.xlu0 %1526
  %v1528 = vsel %vm160, %v1390, 0.0
  %1529 = vadd.xlane.f32.xlu0 %v1528
  %v1530 = vpop.xlane.xlu0 %1529
  %v1531 = vsel %vm160, %v1391, 0.0
  %1532 = vadd.xlane.f32.xlu0 %v1531
  %v1533 = vpop.xlane.xlu0 %1532
  %v1534 = vsel %vm160, %v1392, 0.0
  %1535 = vadd.xlane.f32.xlu0 %v1534
  %v1536 = vpop.xlane.xlu0 %1535
  %v1537 = vsel %vm160, %v1393, 0.0
  %1538 = vadd.xlane.f32.xlu0 %v1537
  %v1539 = vpop.xlane.xlu0 %1538
  %v1540 = vsel %vm160, %v1394, 0.0
  %1541 = vadd.xlane.f32.xlu0 %v1540
  %v1542 = vpop.xlane.xlu0 %1541
  %v1543 = vsel %vm160, %v1395, 0.0
  %1544 = vadd.xlane.f32.xlu0 %v1543
  %v1545 = vpop.xlane.xlu0 %1544
  %v1546 = vsel %vm160, %v1396, 0.0
  %1547 = vadd.xlane.f32.xlu0 %v1546
  %v1548 = vpop.xlane.xlu0 %1547
  %v1549 = vsel %vm160, %v1397, 0.0
  %1550 = vadd.xlane.f32.xlu0 %v1549
  %v1551 = vpop.xlane.xlu0 %1550
  %v1552 = vsel %vm160, %v1398, 0.0
  %1553 = vadd.xlane.f32.xlu0 %v1552
  %v1554 = vpop.xlane.xlu0 %1553
  %v1555 = vsel %vm160, %v1399, 0.0
  %1556 = vadd.xlane.f32.xlu0 %v1555
  %v1557 = vpop.xlane.xlu0 %1556
  %v1558 = vsel %vm160, %v1400, 0.0
  %1559 = vadd.xlane.f32.xlu0 %v1558
  %v1560 = vpop.xlane.xlu0 %1559
  %v1561 = vsel %vm160, %v1401, 0.0
  %1562 = vadd.xlane.f32.xlu0 %v1561
  %v1563 = vpop.xlane.xlu0 %1562
  %v1564 = vsel %vm160, %v1402, 0.0
  %1565 = vadd.xlane.f32.xlu0 %v1564
  %v1566 = vpop.xlane.xlu0 %1565
  %v1567 = vsel %vm160, %v1403, 0.0
  %1568 = vadd.xlane.f32.xlu0 %v1567
  %v1569 = vpop.xlane.xlu0 %1568
  %v1570 = vsel %vm160, %v1404, 0.0
  %1571 = vadd.xlane.f32.xlu0 %v1570
  %v1572 = vpop.xlane.xlu0 %1571
  %v1573 = vsel %vm160, %v1405, 0.0
  %1574 = vadd.xlane.f32.xlu0 %v1573
  %v1575 = vpop.xlane.xlu0 %1574
  %v1576 = vsel %vm160, %v1406, 0.0
  %1577 = vadd.xlane.f32.xlu0 %v1576
  %v1578 = vpop.xlane.xlu0 %1577
  %v1579 = vsel %vm160, %v1407, 0.0
  %1580 = vadd.xlane.f32.xlu0 %v1579
  %v1581 = vpop.xlane.xlu0 %1580
  %v1582 = vsel %vm160, %v1408, 0.0
  %1583 = vadd.xlane.f32.xlu0 %v1582
  %v1584 = vpop.xlane.xlu0 %1583
  %v1585 = vsel %vm160, %v1409, 0.0
  %1586 = vadd.xlane.f32.xlu0 %v1585
  %v1587 = vpop.xlane.xlu0 %1586
  %v1588 = vsel %vm160, %v1410, 0.0
  %1589 = vadd.xlane.f32.xlu0 %v1588
  %v1590 = vpop.xlane.xlu0 %1589
  %v1591 = vsel %vm160, %v1411, 0.0
  %1592 = vadd.xlane.f32.xlu0 %v1591
  %v1593 = vpop.xlane.xlu0 %1592
  %v1594 = vsel %vm160, %v1412, 0.0
  %1595 = vadd.xlane.f32.xlu0 %v1594
  %v1596 = vpop.xlane.xlu0 %1595
  %v1597 = vsel %vm160, %v1413, 0.0
  %1598 = vadd.xlane.f32.xlu0 %v1597
  %v1599 = vpop.xlane.xlu0 %1598
  %v1600 = vsel %vm160, %v1414, 0.0
  %1601 = vadd.xlane.f32.xlu0 %v1600
  %v1602 = vpop.xlane.xlu0 %1601
  %v1603 = vsel %vm160, %v1415, 0.0
  %1604 = vadd.xlane.f32.xlu0 %v1603
  %v1605 = vpop.xlane.xlu0 %1604
  %v1606 = vsel %vm160, %v1416, 0.0
  %1607 = vadd.xlane.f32.xlu0 %v1606
  %v1608 = vpop.xlane.xlu0 %1607
  %v1609 = vsel %vm160, %v1417, 0.0
  %1610 = vadd.xlane.f32.xlu0 %v1609
  %v1611 = vpop.xlane.xlu0 %1610
  %v1612 = vsel %vm160, %v1418, 0.0
  %1613 = vadd.xlane.f32.xlu0 %v1612
  %v1614 = vpop.xlane.xlu0 %1613
  %v1615 = vsel %vm160, %v1419, 0.0
  %1616 = vadd.xlane.f32.xlu0 %v1615
  %v1617 = vpop.xlane.xlu0 %1616
  %v1618 = vsel %vm160, %v1420, 0.0
  %1619 = vadd.xlane.f32.xlu0 %v1618
  %v1620 = vpop.xlane.xlu0 %1619
  %v1621 = vsel %vm160, %v1421, 0.0
  %1622 = vadd.xlane.f32.xlu0 %v1621
  %v1623 = vpop.xlane.xlu0 %1622
  %v1624 = vsel %vm160, %v1422, 0.0
  %1625 = vadd.xlane.f32.xlu0 %v1624
  %v1626 = vpop.xlane.xlu0 %1625
  %v1627 = vsel %vm160, %v1423, 0.0
  %1628 = vadd.xlane.f32.xlu0 %v1627
  %v1629 = vpop.xlane.xlu0 %1628
  %v1630 = vsel %vm160, %v1424, 0.0
  %1631 = vadd.xlane.f32.xlu0 %v1630
  %v1632 = vpop.xlane.xlu0 %1631
  %v1633 = vsel %vm160, %v1425, 0.0
  %1634 = vadd.xlane.f32.xlu0 %v1633
  %v1635 = vpop.xlane.xlu0 %1634
  %v1636 = vsel %vm160, %v1426, 0.0
  %1637 = vadd.xlane.f32.xlu0 %v1636
  %v1638 = vpop.xlane.xlu0 %1637
  %v1639 = vsel %vm160, %v1427, 0.0
  %1640 = vadd.xlane.f32.xlu0 %v1639
  %v1641 = vpop.xlane.xlu0 %1640
  %v1642 = vsel %vm160, %v1428, 0.0
  %1643 = vadd.xlane.f32.xlu0 %v1642
  %v1644 = vpop.xlane.xlu0 %1643
  %v1645 = vsel %vm160, %v1429, 0.0
  %1646 = vadd.xlane.f32.xlu0 %v1645
  %v1647 = vpop.xlane.xlu0 %1646
  %v1648 = vsel %vm160, %v1430, 0.0
  %1649 = vadd.xlane.f32.xlu0 %v1648
  %v1650 = vpop.xlane.xlu0 %1649
  %v1651 = vsel %vm160, %v1431, 0.0
  %1652 = vadd.xlane.f32.xlu0 %v1651
  %v1653 = vpop.xlane.xlu0 %1652
  %v1654 = vsel %vm160, %v1432, 0.0
  %1655 = vadd.xlane.f32.xlu0 %v1654
  %v1656 = vpop.xlane.xlu0 %1655
  %v1657 = vsel %vm160, %v1433, 0.0
  %1658 = vadd.xlane.f32.xlu0 %v1657
  %v1659 = vpop.xlane.xlu0 %1658
  %v1660 = vsel %vm160, %v1434, 0.0
  %1661 = vadd.xlane.f32.xlu0 %v1660
  %v1662 = vpop.xlane.xlu0 %1661
  %v1663 = vsel %vm160, %v1435, 0.0
  %1664 = vadd.xlane.f32.xlu0 %v1663
  %v1665 = vpop.xlane.xlu0 %1664
  %v1666 = vsel %vm160, %v1436, 0.0
  %1667 = vadd.xlane.f32.xlu0 %v1666
  %v1668 = vpop.xlane.xlu0 %1667
  %v1669 = vsel %vm160, %v1437, 0.0
  %1670 = vadd.xlane.f32.xlu0 %v1669
  %v1671 = vpop.xlane.xlu0 %1670
  %v1672 = vsel %vm160, %v1438, 0.0
  %1673 = vadd.xlane.f32.xlu0 %v1672
  %v1674 = vpop.xlane.xlu0 %1673
  %v1675 = vsel %vm160, %v1439, 0.0
  %1676 = vadd.xlane.f32.xlu0 %v1675
  %v1677 = vpop.xlane.xlu0 %1676
  %v1678 = vsel %vm160, %v1440, 0.0
  %1679 = vadd.xlane.f32.xlu0 %v1678
  %v1680 = vpop.xlane.xlu0 %1679
  %v1681 = vsel %vm160, %v1441, 0.0
  %1682 = vadd.xlane.f32.xlu0 %v1681
  %v1683 = vpop.xlane.xlu0 %1682
  %v1684 = vsel %vm160, %v1442, 0.0
  %1685 = vadd.xlane.f32.xlu0 %v1684
  %v1686 = vpop.xlane.xlu0 %1685
  %v1687 = vsel %vm160, %v1443, 0.0
  %1688 = vadd.xlane.f32.xlu0 %v1687
  %v1689 = vpop.xlane.xlu0 %1688
  %v1690 = vsel %vm160, %v1444, 0.0
  %1691 = vadd.xlane.f32.xlu0 %v1690
  %v1692 = vpop.xlane.xlu0 %1691
  %v1693 = vsel %vm160, %v1445, 0.0
  %1694 = vadd.xlane.f32.xlu0 %v1693
  %v1695 = vpop.xlane.xlu0 %1694
  %v1696 = vsel %vm160, %v1446, 0.0
  %1697 = vadd.xlane.f32.xlu0 %v1696
  %v1698 = vpop.xlane.xlu0 %1697
  %v1699 = vsel %vm160, %v1447, 0.0
  %1700 = vadd.xlane.f32.xlu0 %v1699
  %v1701 = vpop.xlane.xlu0 %1700
  %v1702 = vsel %vm160, %v1448, 0.0
  %1703 = vadd.xlane.f32.xlu0 %v1702
  %v1704 = vpop.xlane.xlu0 %1703
  %v1705 = vsel %vm160, %v1449, 0.0
  %1706 = vadd.xlane.f32.xlu0 %v1705
  %v1707 = vpop.xlane.xlu0 %1706
  %v1708 = vsel %vm160, %v1450, 0.0
  %1709 = vadd.xlane.f32.xlu0 %v1708
  %v1710 = vpop.xlane.xlu0 %1709
  %v1711 = vsel %vm160, %v1451, 0.0
  %1712 = vadd.xlane.f32.xlu0 %v1711
  %v1713 = vpop.xlane.xlu0 %1712
  %v1714 = vsel %vm160, %v1452, 0.0
  %1715 = vadd.xlane.f32.xlu0 %v1714
  %v1716 = vpop.xlane.xlu0 %1715
  %v1717 = vsel %vm160, %v1453, 0.0
  %1718 = vadd.xlane.f32.xlu0 %v1717
  %v1719 = vpop.xlane.xlu0 %1718
  %v1720 = vsel %vm160, %v1454, 0.0
  %1721 = vadd.xlane.f32.xlu0 %v1720
  %v1722 = vpop.xlane.xlu0 %1721
  %v1723 = vsel %vm160, %v1455, 0.0
  %1724 = vadd.xlane.f32.xlu0 %v1723
  %v1725 = vpop.xlane.xlu0 %1724
  %v1726 = vsel %vm160, %v1456, 0.0
  %1727 = vadd.xlane.f32.xlu0 %v1726
  %v1728 = vpop.xlane.xlu0 %1727
  %v1729 = vsel %vm160, %v1457, 0.0
  %1730 = vadd.xlane.f32.xlu0 %v1729
  %v1731 = vpop.xlane.xlu0 %1730
  %v1732 = vsel %vm160, %v1458, 0.0
  %1733 = vadd.xlane.f32.xlu0 %v1732
  %v1734 = vpop.xlane.xlu0 %1733
  %v1735 = vsel %vm160, %v1459, 0.0
  %1736 = vadd.xlane.f32.xlu0 %v1735
  %v1737 = vpop.xlane.xlu0 %1736
  %v1738 = vsel %vm160, %v1460, 0.0
  %1739 = vadd.xlane.f32.xlu0 %v1738
  %v1740 = vpop.xlane.xlu0 %1739
  %v1741 = vsel %vm160, %v1461, 0.0
  %1742 = vadd.xlane.f32.xlu0 %v1741
  %v1743 = vpop.xlane.xlu0 %1742
  %v1744 = vsel %vm160, %v1462, 0.0
  %1745 = vadd.xlane.f32.xlu0 %v1744
  %v1746 = vpop.xlane.xlu0 %1745
  %v1747 = vsel %vm160, %v1463, 0.0
  %1748 = vadd.xlane.f32.xlu0 %v1747
  %v1749 = vpop.xlane.xlu0 %1748
  %v1750 = vsel %vm160, %v1464, 0.0
  %1751 = vadd.xlane.f32.xlu0 %v1750
  %v1752 = vpop.xlane.xlu0 %1751
  %v1753 = vsel %vm160, %v1465, 0.0
  %1754 = vadd.xlane.f32.xlu0 %v1753
  %v1755 = vpop.xlane.xlu0 %1754
  %v1756 = vsel %vm160, %v1466, 0.0
  %1757 = vadd.xlane.f32.xlu0 %v1756
  %v1758 = vpop.xlane.xlu0 %1757
  %v1759 = vsel %vm160, %v1467, 0.0
  %1760 = vadd.xlane.f32.xlu0 %v1759
  %v1761 = vpop.xlane.xlu0 %1760
  %v1762 = vsel %vm160, %v1468, 0.0
  %1763 = vadd.xlane.f32.xlu0 %v1762
  %v1764 = vpop.xlane.xlu0 %1763
  %v1765 = vsel %vm160, %v1469, 0.0
  %1766 = vadd.xlane.f32.xlu0 %v1765
  %v1767 = vpop.xlane.xlu0 %1766
  %v1768 = vsel %vm160, %v1470, 0.0
  %1769 = vadd.xlane.f32.xlu0 %v1768
  %v1770 = vpop.xlane.xlu0 %1769
  %v1771 = vsel %vm160, %v1471, 0.0
  %1772 = vadd.xlane.f32.xlu0 %v1771
  %v1773 = vpop.xlane.xlu0 %1772
  %v1774 = vsel %vm160, %v1472, 0.0
  %1775 = vadd.xlane.f32.xlu0 %v1774
  %v1776 = vpop.xlane.xlu0 %1775
  %v1777 = vsel %vm160, %v1473, 0.0
  %1778 = vadd.xlane.f32.xlu0 %v1777
  %v1779 = vpop.xlane.xlu0 %1778
  %v1780 = vsel %vm160, %v1474, 0.0
  %1781 = vadd.xlane.f32.xlu0 %v1780
  %v1782 = vpop.xlane.xlu0 %1781
  %v1783 = vsel %vm160, %v1475, 0.0
  %1784 = vadd.xlane.f32.xlu0 %v1783
  %v1785 = vpop.xlane.xlu0 %1784
  %v1786 = vsel %vm160, %v1476, 0.0
  %1787 = vadd.xlane.f32.xlu0 %v1786
  %v1788 = vpop.xlane.xlu0 %1787
  %v1789 = vsel %vm160, %v1477, 0.0
  %1790 = vadd.xlane.f32.xlu0 %v1789
  %v1791 = vpop.xlane.xlu0 %1790
  %v1792 = vsel %vm160, %v1478, 0.0
  %1793 = vadd.xlane.f32.xlu0 %v1792
  %v1794 = vpop.xlane.xlu0 %1793
  %v1795 = vsel %vm160, %v1479, 0.0
  %1796 = vadd.xlane.f32.xlu0 %v1795
  %v1797 = vpop.xlane.xlu0 %1796
  %v1798 = vsel %vm160, %v1480, 0.0
  %1799 = vadd.xlane.f32.xlu0 %v1798
  %v1800 = vpop.xlane.xlu0 %1799
  %v1801 = vsel %vm160, %v1481, 0.0
  %1802 = vadd.xlane.f32.xlu0 %v1801
  %v1803 = vpop.xlane.xlu0 %1802
  %v1804 = vsel %vm160, %v1482, 0.0
  %1805 = vadd.xlane.f32.xlu0 %v1804
  %v1806 = vpop.xlane.xlu0 %1805
  %v1807 = vsel %vm160, %v1483, 0.0
  %1808 = vadd.xlane.f32.xlu0 %v1807
  %v1809 = vpop.xlane.xlu0 %1808
  %v1810 = vsel %vm160, %v1484, 0.0
  %1811 = vadd.xlane.f32.xlu0 %v1810
  %v1812 = vpop.xlane.xlu0 %1811
  %v1813 = vsel %vm160, %v1485, 0.0
  %1814 = vadd.xlane.f32.xlu0 %v1813
  %v1815 = vpop.xlane.xlu0 %1814
  %v1816 = vsel %vm160, %v1486, 0.0
  %1817 = vadd.xlane.f32.xlu0 %v1816
  %v1818 = vpop.xlane.xlu0 %1817
  %v1819 = vsel %vm160, %v1487, 0.0
  %1820 = vadd.xlane.f32.xlu0 %v1819
  %v1821 = vpop.xlane.xlu0 %1820
  %v1822 = vsel %vm160, %v1488, 0.0
  %1823 = vadd.xlane.f32.xlu0 %v1822
  %v1824 = vpop.xlane.xlu0 %1823
  %v1825 = vsel %vm160, %v1489, 0.0
  %1826 = vadd.xlane.f32.xlu0 %v1825
  %v1827 = vpop.xlane.xlu0 %1826
  %v1828 = vsel %vm160, %v1490, 0.0
  %1829 = vadd.xlane.f32.xlu0 %v1828
  %v1830 = vpop.xlane.xlu0 %1829
  %v1831 = vsel %vm160, %v1491, 0.0
  %1832 = vadd.xlane.f32.xlu0 %v1831
  %v1833 = vpop.xlane.xlu0 %1832
  %v1834 = vsel %vm160, %v1492, 0.0
  %1835 = vadd.xlane.f32.xlu0 %v1834
  %v1836 = vpop.xlane.xlu0 %1835
  %v1837 = vsel %vm160, %v1493, 0.0
  %1838 = vadd.xlane.f32.xlu0 %v1837
  %v1839 = vpop.xlane.xlu0 %1838
  %v1840 = vsel %vm160, %v1494, 0.0
  %1841 = vadd.xlane.f32.xlu0 %v1840
  %v1842 = vpop.xlane.xlu0 %1841
  %v1843 = vsel %vm160, %v1495, 0.0
  %1844 = vadd.xlane.f32.xlu0 %v1843
  %v1845 = vpop.xlane.xlu0 %1844
  %v1846 = vsel %vm160, %v1496, 0.0
  %1847 = vadd.xlane.f32.xlu0 %v1846
  %v1848 = vpop.xlane.xlu0 %1847
  %v1849 = vsel %vm160, %v1497, 0.0
  %1850 = vadd.xlane.f32.xlu0 %v1849
  %v1851 = vpop.xlane.xlu0 %1850
  %v1852 = vsel %vm160, %v1498, 0.0
  %1853 = vadd.xlane.f32.xlu0 %v1852
  %v1854 = vpop.xlane.xlu0 %1853
  %v1855 = vsel %vm160, %v1499, 0.0
  %1856 = vadd.xlane.f32.xlu0 %v1855
  %v1857 = vpop.xlane.xlu0 %1856
  %v1858 = vsel %vm160, %v1500, 0.0
  %1859 = vadd.xlane.f32.xlu0 %v1858
  %v1860 = vpop.xlane.xlu0 %1859
  %v1861 = vsel %vm160, %v1501, 0.0
  %1862 = vadd.xlane.f32.xlu0 %v1861
  %v1863 = vpop.xlane.xlu0 %1862
  %v1864 = vsel %vm160, %v1502, 0.0
  %1865 = vadd.xlane.f32.xlu0 %v1864
  %v1866 = vpop.xlane.xlu0 %1865
  %v1867 = vsel %vm160, %v1503, 0.0
  %1868 = vadd.xlane.f32.xlu0 %v1867
  %v1869 = vpop.xlane.xlu0 %1868
  %v1870 = vsel %vm160, %v1504, 0.0
  %1871 = vadd.xlane.f32.xlu0 %v1870
  %v1872 = vpop.xlane.xlu0 %1871
  %v1873 = vsel %vm160, %v1505, 0.0
  %1874 = vadd.xlane.f32.xlu0 %v1873
  %v1875 = vpop.xlane.xlu0 %1874
  %v1876 = vsel %vm160, %v1506, 0.0
  %1877 = vadd.xlane.f32.xlu0 %v1876
  %v1878 = vpop.xlane.xlu0 %1877
  %v1879 = vsel %vm160, %v1507, 0.0
  %1880 = vadd.xlane.f32.xlu0 %v1879
  %v1881 = vpop.xlane.xlu0 %1880
  %v1882 = vsel %vm160, %v1508, 0.0
  %1883 = vadd.xlane.f32.xlu0 %v1882
  %v1884 = vpop.xlane.xlu0 %1883
  %v1885 = vsel %vm160, %v1509, 0.0
  %1886 = vadd.xlane.f32.xlu0 %v1885
  %v1887 = vpop.xlane.xlu0 %1886
  %v1888 = vsel %vm160, %v1510, 0.0
  %1889 = vadd.xlane.f32.xlu0 %v1888
  %v1890 = vpop.xlane.xlu0 %1889
  %v1891 = vsel %vm160, %v1511, 0.0
  %1892 = vadd.xlane.f32.xlu0 %v1891
  %v1893 = vpop.xlane.xlu0 %1892
  %v1894 = vsel %vm160, %v1512, 0.0
  %1895 = vadd.xlane.f32.xlu0 %v1894
  %v1896 = vpop.xlane.xlu0 %1895
  %s1897 = sld [smem:[#allocation2]]
  %v1898 = vstv %s1897
  %v1899 = vadd.f32 %v1515, %v1898
  %v1900 = vadd.f32 %v1518, %v1898
  %v1901 = vadd.f32 %v1521, %v1898
  %v1902 = vadd.f32 %v1524, %v1898
  %v1903 = vadd.f32 %v1527, %v1898
  %v1904 = vadd.f32 %v1530, %v1898
  %v1905 = vadd.f32 %v1533, %v1898
  %v1906 = vadd.f32 %v1536, %v1898
  %v1907 = vadd.f32 %v1539, %v1898
  %v1908 = vadd.f32 %v1542, %v1898
  %v1909 = vadd.f32 %v1545, %v1898
  %v1910 = vadd.f32 %v1548, %v1898
  %v1911 = vadd.f32 %v1551, %v1898
  %v1912 = vadd.f32 %v1554, %v1898
  %v1913 = vadd.f32 %v1557, %v1898
  %v1914 = vadd.f32 %v1560, %v1898
  %v1915 = vadd.f32 %v1563, %v1898
  %v1916 = vadd.f32 %v1566, %v1898
  %v1917 = vadd.f32 %v1569, %v1898
  %v1918 = vadd.f32 %v1572, %v1898
  %v1919 = vadd.f32 %v1575, %v1898
  %v1920 = vadd.f32 %v1578, %v1898
  %v1921 = vadd.f32 %v1581, %v1898
  %v1922 = vadd.f32 %v1584, %v1898
  %v1923 = vadd.f32 %v1587, %v1898
  %v1924 = vadd.f32 %v1590, %v1898
  %v1925 = vadd.f32 %v1593, %v1898
  %v1926 = vadd.f32 %v1596, %v1898
  %v1927 = vadd.f32 %v1599, %v1898
  %v1928 = vadd.f32 %v1602, %v1898
  %v1929 = vadd.f32 %v1605, %v1898
  %v1930 = vadd.f32 %v1608, %v1898
  %v1931 = vadd.f32 %v1611, %v1898
  %v1932 = vadd.f32 %v1614, %v1898
  %v1933 = vadd.f32 %v1617, %v1898
  %v1934 = vadd.f32 %v1620, %v1898
  %v1935 = vadd.f32 %v1623, %v1898
  %v1936 = vadd.f32 %v1626, %v1898
  %v1937 = vadd.f32 %v1629, %v1898
  %v1938 = vadd.f32 %v1632, %v1898
  %v1939 = vadd.f32 %v1635, %v1898
  %v1940 = vadd.f32 %v1638, %v1898
  %v1941 = vadd.f32 %v1641, %v1898
  %v1942 = vadd.f32 %v1644, %v1898
  %v1943 = vadd.f32 %v1647, %v1898
  %v1944 = vadd.f32 %v1650, %v1898
  %v1945 = vadd.f32 %v1653, %v1898
  %v1946 = vadd.f32 %v1656, %v1898
  %v1947 = vadd.f32 %v1659, %v1898
  %v1948 = vadd.f32 %v1662, %v1898
  %v1949 = vadd.f32 %v1665, %v1898
  %v1950 = vadd.f32 %v1668, %v1898
  %v1951 = vadd.f32 %v1671, %v1898
  %v1952 = vadd.f32 %v1674, %v1898
  %v1953 = vadd.f32 %v1677, %v1898
  %v1954 = vadd.f32 %v1680, %v1898
  %v1955 = vadd.f32 %v1683, %v1898
  %v1956 = vadd.f32 %v1686, %v1898
  %v1957 = vadd.f32 %v1689, %v1898
  %v1958 = vadd.f32 %v1692, %v1898
  %v1959 = vadd.f32 %v1695, %v1898
  %v1960 = vadd.f32 %v1698, %v1898
  %v1961 = vadd.f32 %v1701, %v1898
  %v1962 = vadd.f32 %v1704, %v1898
  %v1963 = vadd.f32 %v1707, %v1898
  %v1964 = vadd.f32 %v1710, %v1898
  %v1965 = vadd.f32 %v1713, %v1898
  %v1966 = vadd.f32 %v1716, %v1898
  %v1967 = vadd.f32 %v1719, %v1898
  %v1968 = vadd.f32 %v1722, %v1898
  %v1969 = vadd.f32 %v1725, %v1898
  %v1970 = vadd.f32 %v1728, %v1898
  %v1971 = vadd.f32 %v1731, %v1898
  %v1972 = vadd.f32 %v1734, %v1898
  %v1973 = vadd.f32 %v1737, %v1898
  %v1974 = vadd.f32 %v1740, %v1898
  %v1975 = vadd.f32 %v1743, %v1898
  %v1976 = vadd.f32 %v1746, %v1898
  %v1977 = vadd.f32 %v1749, %v1898
  %v1978 = vadd.f32 %v1752, %v1898
  %v1979 = vadd.f32 %v1755, %v1898
  %v1980 = vadd.f32 %v1758, %v1898
  %v1981 = vadd.f32 %v1761, %v1898
  %v1982 = vadd.f32 %v1764, %v1898
  %v1983 = vadd.f32 %v1767, %v1898
  %v1984 = vadd.f32 %v1770, %v1898
  %v1985 = vadd.f32 %v1773, %v1898
  %v1986 = vadd.f32 %v1776, %v1898
  %v1987 = vadd.f32 %v1779, %v1898
  %v1988 = vadd.f32 %v1782, %v1898
  %v1989 = vadd.f32 %v1785, %v1898
  %v1990 = vadd.f32 %v1788, %v1898
  %v1991 = vadd.f32 %v1791, %v1898
  %v1992 = vadd.f32 %v1794, %v1898
  %v1993 = vadd.f32 %v1797, %v1898
  %v1994 = vadd.f32 %v1800, %v1898
  %v1995 = vadd.f32 %v1803, %v1898
  %v1996 = vadd.f32 %v1806, %v1898
  %v1997 = vadd.f32 %v1809, %v1898
  %v1998 = vadd.f32 %v1812, %v1898
  %v1999 = vadd.f32 %v1815, %v1898
  %v2000 = vadd.f32 %v1818, %v1898
  %v2001 = vadd.f32 %v1821, %v1898
  %v2002 = vadd.f32 %v1824, %v1898
  %v2003 = vadd.f32 %v1827, %v1898
  %v2004 = vadd.f32 %v1830, %v1898
  %v2005 = vadd.f32 %v1833, %v1898
  %v2006 = vadd.f32 %v1836, %v1898
  %v2007 = vadd.f32 %v1839, %v1898
  %v2008 = vadd.f32 %v1842, %v1898
  %v2009 = vadd.f32 %v1845, %v1898
  %v2010 = vadd.f32 %v1848, %v1898
  %v2011 = vadd.f32 %v1851, %v1898
  %v2012 = vadd.f32 %v1854, %v1898
  %v2013 = vadd.f32 %v1857, %v1898
  %v2014 = vadd.f32 %v1860, %v1898
  %v2015 = vadd.f32 %v1863, %v1898
  %v2016 = vadd.f32 %v1866, %v1898
  %v2017 = vadd.f32 %v1869, %v1898
  %v2018 = vadd.f32 %v1872, %v1898
  %v2019 = vadd.f32 %v1875, %v1898
  %v2020 = vadd.f32 %v1878, %v1898
  %v2021 = vadd.f32 %v1881, %v1898
  %v2022 = vadd.f32 %v1884, %v1898
  %v2023 = vadd.f32 %v1887, %v1898
  %v2024 = vadd.f32 %v1890, %v1898
  %v2025 = vadd.f32 %v1893, %v1898
  %v2026 = vadd.f32 %v1896, %v1898
  %v2027 = vxor.u32 %v1899, 2147483648
  %v2028 = vxor.u32 %v1900, 2147483648
  %v2029 = vxor.u32 %v1901, 2147483648
  %v2030 = vxor.u32 %v1902, 2147483648
  %v2031 = vxor.u32 %v1903, 2147483648
  %v2032 = vxor.u32 %v1904, 2147483648
  %v2033 = vxor.u32 %v1905, 2147483648
  %v2034 = vxor.u32 %v1906, 2147483648
  %v2035 = vxor.u32 %v1907, 2147483648
  %v2036 = vxor.u32 %v1908, 2147483648
  %v2037 = vxor.u32 %v1909, 2147483648
  %v2038 = vxor.u32 %v1910, 2147483648
  %v2039 = vxor.u32 %v1911, 2147483648
  %v2040 = vxor.u32 %v1912, 2147483648
  %v2041 = vxor.u32 %v1913, 2147483648
  %v2042 = vxor.u32 %v1914, 2147483648
  %v2043 = vxor.u32 %v1915, 2147483648
  %v2044 = vxor.u32 %v1916, 2147483648
  %v2045 = vxor.u32 %v1917, 2147483648
  %v2046 = vxor.u32 %v1918, 2147483648
  %v2047 = vxor.u32 %v1919, 2147483648
  %v2048 = vxor.u32 %v1920, 2147483648
  %v2049 = vxor.u32 %v1921, 2147483648
  %v2050 = vxor.u32 %v1922, 2147483648
  %v2051 = vxor.u32 %v1923, 2147483648
  %v2052 = vxor.u32 %v1924, 2147483648
  %v2053 = vxor.u32 %v1925, 2147483648
  %v2054 = vxor.u32 %v1926, 2147483648
  %v2055 = vxor.u32 %v1927, 2147483648
  %v2056 = vxor.u32 %v1928, 2147483648
  %v2057 = vxor.u32 %v1929, 2147483648
  %v2058 = vxor.u32 %v1930, 2147483648
  %v2059 = vxor.u32 %v1931, 2147483648
  %v2060 = vxor.u32 %v1932, 2147483648
  %v2061 = vxor.u32 %v1933, 2147483648
  %v2062 = vxor.u32 %v1934, 2147483648
  %v2063 = vxor.u32 %v1935, 2147483648
  %v2064 = vxor.u32 %v1936, 2147483648
  %v2065 = vxor.u32 %v1937, 2147483648
  %v2066 = vxor.u32 %v1938, 2147483648
  %v2067 = vxor.u32 %v1939, 2147483648
  %v2068 = vxor.u32 %v1940, 2147483648
  %v2069 = vxor.u32 %v1941, 2147483648
  %v2070 = vxor.u32 %v1942, 2147483648
  %v2071 = vxor.u32 %v1943, 2147483648
  %v2072 = vxor.u32 %v1944, 2147483648
  %v2073 = vxor.u32 %v1945, 2147483648
  %v2074 = vxor.u32 %v1946, 2147483648
  %v2075 = vxor.u32 %v1947, 2147483648
  %v2076 = vxor.u32 %v1948, 2147483648
  %v2077 = vxor.u32 %v1949, 2147483648
  %v2078 = vxor.u32 %v1950, 2147483648
  %v2079 = vxor.u32 %v1951, 2147483648
  %v2080 = vxor.u32 %v1952, 2147483648
  %v2081 = vxor.u32 %v1953, 2147483648
  %v2082 = vxor.u32 %v1954, 2147483648
  %v2083 = vxor.u32 %v1955, 2147483648
  %v2084 = vxor.u32 %v1956, 2147483648
  %v2085 = vxor.u32 %v1957, 2147483648
  %v2086 = vxor.u32 %v1958, 2147483648
  %v2087 = vxor.u32 %v1959, 2147483648
  %v2088 = vxor.u32 %v1960, 2147483648
  %v2089 = vxor.u32 %v1961, 2147483648
  %v2090 = vxor.u32 %v1962, 2147483648
  %v2091 = vxor.u32 %v1963, 2147483648
  %v2092 = vxor.u32 %v1964, 2147483648
  %v2093 = vxor.u32 %v1965, 2147483648
  %v2094 = vxor.u32 %v1966, 2147483648
  %v2095 = vxor.u32 %v1967, 2147483648
  %v2096 = vxor.u32 %v1968, 2147483648
  %v2097 = vxor.u32 %v1969, 2147483648
  %v2098 = vxor.u32 %v1970, 2147483648
  %v2099 = vxor.u32 %v1971, 2147483648
  %v2100 = vxor.u32 %v1972, 2147483648
  %v2101 = vxor.u32 %v1973, 2147483648
  %v2102 = vxor.u32 %v1974, 2147483648
  %v2103 = vxor.u32 %v1975, 2147483648
  %v2104 = vxor.u32 %v1976, 2147483648
  %v2105 = vxor.u32 %v1977, 2147483648
  %v2106 = vxor.u32 %v1978, 2147483648
  %v2107 = vxor.u32 %v1979, 2147483648
  %v2108 = vxor.u32 %v1980, 2147483648
  %v2109 = vxor.u32 %v1981, 2147483648
  %v2110 = vxor.u32 %v1982, 2147483648
  %v2111 = vxor.u32 %v1983, 2147483648
  %v2112 = vxor.u32 %v1984, 2147483648
  %v2113 = vxor.u32 %v1985, 2147483648
  %v2114 = vxor.u32 %v1986, 2147483648
  %v2115 = vxor.u32 %v1987, 2147483648
  %v2116 = vxor.u32 %v1988, 2147483648
  %v2117 = vxor.u32 %v1989, 2147483648
  %v2118 = vxor.u32 %v1990, 2147483648
  %v2119 = vxor.u32 %v1991, 2147483648
  %v2120 = vxor.u32 %v1992, 2147483648
  %v2121 = vxor.u32 %v1993, 2147483648
  %v2122 = vxor.u32 %v1994, 2147483648
  %v2123 = vxor.u32 %v1995, 2147483648
  %v2124 = vxor.u32 %v1996, 2147483648
  %v2125 = vxor.u32 %v1997, 2147483648
  %v2126 = vxor.u32 %v1998, 2147483648
  %v2127 = vxor.u32 %v1999, 2147483648
  %v2128 = vxor.u32 %v2000, 2147483648
  %v2129 = vxor.u32 %v2001, 2147483648
  %v2130 = vxor.u32 %v2002, 2147483648
  %v2131 = vxor.u32 %v2003, 2147483648
  %v2132 = vxor.u32 %v2004, 2147483648
  %v2133 = vxor.u32 %v2005, 2147483648
  %v2134 = vxor.u32 %v2006, 2147483648
  %v2135 = vxor.u32 %v2007, 2147483648
  %v2136 = vxor.u32 %v2008, 2147483648
  %v2137 = vxor.u32 %v2009, 2147483648
  %v2138 = vxor.u32 %v2010, 2147483648
  %v2139 = vxor.u32 %v2011, 2147483648
  %v2140 = vxor.u32 %v2012, 2147483648
  %v2141 = vxor.u32 %v2013, 2147483648
  %v2142 = vxor.u32 %v2014, 2147483648
  %v2143 = vxor.u32 %v2015, 2147483648
  %v2144 = vxor.u32 %v2016, 2147483648
  %v2145 = vxor.u32 %v2017, 2147483648
  %v2146 = vxor.u32 %v2018, 2147483648
  %v2147 = vxor.u32 %v2019, 2147483648
  %v2148 = vxor.u32 %v2020, 2147483648
  %v2149 = vxor.u32 %v2021, 2147483648
  %v2150 = vxor.u32 %v2022, 2147483648
  %v2151 = vxor.u32 %v2023, 2147483648
  %v2152 = vxor.u32 %v2024, 2147483648
  %v2153 = vxor.u32 %v2025, 2147483648
  %v2154 = vxor.u32 %v2026, 2147483648
  %v2155 = vmul.f32 %v2027, 1.442695
  %v2156 = vpow.pop %v2155
  %v2157 = vmul.f32 %v2028, 1.442695
  %v2158 = vpow.pop %v2157
  %v2159 = vmul.f32 %v2029, 1.442695
  %v2160 = vpow.pop %v2159
  %v2161 = vmul.f32 %v2030, 1.442695
  %v2162 = vpow.pop %v2161
  %v2163 = vmul.f32 %v2031, 1.442695
  %v2164 = vpow.pop %v2163
  %v2165 = vmul.f32 %v2032, 1.442695
  %v2166 = vpow.pop %v2165
  %v2167 = vmul.f32 %v2033, 1.442695
  %v2168 = vpow.pop %v2167
  %v2169 = vmul.f32 %v2034, 1.442695
  %v2170 = vpow.pop %v2169
  %v2171 = vmul.f32 %v2035, 1.442695
  %v2172 = vpow.pop %v2171
  %v2173 = vmul.f32 %v2036, 1.442695
  %v2174 = vpow.pop %v2173
  %v2175 = vmul.f32 %v2037, 1.442695
  %v2176 = vpow.pop %v2175
  %v2177 = vmul.f32 %v2038, 1.442695
  %v2178 = vpow.pop %v2177
  %v2179 = vmul.f32 %v2039, 1.442695
  %v2180 = vpow.pop %v2179
  %v2181 = vmul.f32 %v2040, 1.442695
  %v2182 = vpow.pop %v2181
  %v2183 = vmul.f32 %v2041, 1.442695
  %v2184 = vpow.pop %v2183
  %v2185 = vmul.f32 %v2042, 1.442695
  %v2186 = vpow.pop %v2185
  %v2187 = vmul.f32 %v2043, 1.442695
  %v2188 = vpow.pop %v2187
  %v2189 = vmul.f32 %v2044, 1.442695
  %v2190 = vpow.pop %v2189
  %v2191 = vmul.f32 %v2045, 1.442695
  %v2192 = vpow.pop %v2191
  %v2193 = vmul.f32 %v2046, 1.442695
  %v2194 = vpow.pop %v2193
  %v2195 = vmul.f32 %v2047, 1.442695
  %v2196 = vpow.pop %v2195
  %v2197 = vmul.f32 %v2048, 1.442695
  %v2198 = vpow.pop %v2197
  %v2199 = vmul.f32 %v2049, 1.442695
  %v2200 = vpow.pop %v2199
  %v2201 = vmul.f32 %v2050, 1.442695
  %v2202 = vpow.pop %v2201
  %v2203 = vmul.f32 %v2051, 1.442695
  %v2204 = vpow.pop %v2203
  %v2205 = vmul.f32 %v2052, 1.442695
  %v2206 = vpow.pop %v2205
  %v2207 = vmul.f32 %v2053, 1.442695
  %v2208 = vpow.pop %v2207
  %v2209 = vmul.f32 %v2054, 1.442695
  %v2210 = vpow.pop %v2209
  %v2211 = vmul.f32 %v2055, 1.442695
  %v2212 = vpow.pop %v2211
  %v2213 = vmul.f32 %v2056, 1.442695
  %v2214 = vpow.pop %v2213
  %v2215 = vmul.f32 %v2057, 1.442695
  %v2216 = vpow.pop %v2215
  %v2217 = vmul.f32 %v2058, 1.442695
  %v2218 = vpow.pop %v2217
  %v2219 = vmul.f32 %v2059, 1.442695
  %v2220 = vpow.pop %v2219
  %v2221 = vmul.f32 %v2060, 1.442695
  %v2222 = vpow.pop %v2221
  %v2223 = vmul.f32 %v2061, 1.442695
  %v2224 = vpow.pop %v2223
  %v2225 = vmul.f32 %v2062, 1.442695
  %v2226 = vpow.pop %v2225
  %v2227 = vmul.f32 %v2063, 1.442695
  %v2228 = vpow.pop %v2227
  %v2229 = vmul.f32 %v2064, 1.442695
  %v2230 = vpow.pop %v2229
  %v2231 = vmul.f32 %v2065, 1.442695
  %v2232 = vpow.pop %v2231
  %v2233 = vmul.f32 %v2066, 1.442695
  %v2234 = vpow.pop %v2233
  %v2235 = vmul.f32 %v2067, 1.442695
  %v2236 = vpow.pop %v2235
  %v2237 = vmul.f32 %v2068, 1.442695
  %v2238 = vpow.pop %v2237
  %v2239 = vmul.f32 %v2069, 1.442695
  %v2240 = vpow.pop %v2239
  %v2241 = vmul.f32 %v2070, 1.442695
  %v2242 = vpow.pop %v2241
  %v2243 = vmul.f32 %v2071, 1.442695
  %v2244 = vpow.pop %v2243
  %v2245 = vmul.f32 %v2072, 1.442695
  %v2246 = vpow.pop %v2245
  %v2247 = vmul.f32 %v2073, 1.442695
  %v2248 = vpow.pop %v2247
  %v2249 = vmul.f32 %v2074, 1.442695
  %v2250 = vpow.pop %v2249
  %v2251 = vmul.f32 %v2075, 1.442695
  %v2252 = vpow.pop %v2251
  %v2253 = vmul.f32 %v2076, 1.442695
  %v2254 = vpow.pop %v2253
  %v2255 = vmul.f32 %v2077, 1.442695
  %v2256 = vpow.pop %v2255
  %v2257 = vmul.f32 %v2078, 1.442695
  %v2258 = vpow.pop %v2257
  %v2259 = vmul.f32 %v2079, 1.442695
  %v2260 = vpow.pop %v2259
  %v2261 = vmul.f32 %v2080, 1.442695
  %v2262 = vpow.pop %v2261
  %v2263 = vmul.f32 %v2081, 1.442695
  %v2264 = vpow.pop %v2263
  %v2265 = vmul.f32 %v2082, 1.442695
  %v2266 = vpow.pop %v2265
  %v2267 = vmul.f32 %v2083, 1.442695
  %v2268 = vpow.pop %v2267
  %v2269 = vmul.f32 %v2084, 1.442695
  %v2270 = vpow.pop %v2269
  %v2271 = vmul.f32 %v2085, 1.442695
  %v2272 = vpow.pop %v2271
  %v2273 = vmul.f32 %v2086, 1.442695
  %v2274 = vpow.pop %v2273
  %v2275 = vmul.f32 %v2087, 1.442695
  %v2276 = vpow.pop %v2275
  %v2277 = vmul.f32 %v2088, 1.442695
  %v2278 = vpow.pop %v2277
  %v2279 = vmul.f32 %v2089, 1.442695
  %v2280 = vpow.pop %v2279
  %v2281 = vmul.f32 %v2090, 1.442695
  %v2282 = vpow.pop %v2281
  %v2283 = vmul.f32 %v2091, 1.442695
  %v2284 = vpow.pop %v2283
  %v2285 = vmul.f32 %v2092, 1.442695
  %v2286 = vpow.pop %v2285
  %v2287 = vmul.f32 %v2093, 1.442695
  %v2288 = vpow.pop %v2287
  %v2289 = vmul.f32 %v2094, 1.442695
  %v2290 = vpow.pop %v2289
  %v2291 = vmul.f32 %v2095, 1.442695
  %v2292 = vpow.pop %v2291
  %v2293 = vmul.f32 %v2096, 1.442695
  %v2294 = vpow.pop %v2293
  %v2295 = vmul.f32 %v2097, 1.442695
  %v2296 = vpow.pop %v2295
  %v2297 = vmul.f32 %v2098, 1.442695
  %v2298 = vpow.pop %v2297
  %v2299 = vmul.f32 %v2099, 1.442695
  %v2300 = vpow.pop %v2299
  %v2301 = vmul.f32 %v2100, 1.442695
  %v2302 = vpow.pop %v2301
  %v2303 = vmul.f32 %v2101, 1.442695
  %v2304 = vpow.pop %v2303
  %v2305 = vmul.f32 %v2102, 1.442695
  %v2306 = vpow.pop %v2305
  %v2307 = vmul.f32 %v2103, 1.442695
  %v2308 = vpow.pop %v2307
  %v2309 = vmul.f32 %v2104, 1.442695
  %v2310 = vpow.pop %v2309
  %v2311 = vmul.f32 %v2105, 1.442695
  %v2312 = vpow.pop %v2311
  %v2313 = vmul.f32 %v2106, 1.442695
  %v2314 = vpow.pop %v2313
  %v2315 = vmul.f32 %v2107, 1.442695
  %v2316 = vpow.pop %v2315
  %v2317 = vmul.f32 %v2108, 1.442695
  %v2318 = vpow.pop %v2317
  %v2319 = vmul.f32 %v2109, 1.442695
  %v2320 = vpow.pop %v2319
  %v2321 = vmul.f32 %v2110, 1.442695
  %v2322 = vpow.pop %v2321
  %v2323 = vmul.f32 %v2111, 1.442695
  %v2324 = vpow.pop %v2323
  %v2325 = vmul.f32 %v2112, 1.442695
  %v2326 = vpow.pop %v2325
  %v2327 = vmul.f32 %v2113, 1.442695
  %v2328 = vpow.pop %v2327
  %v2329 = vmul.f32 %v2114, 1.442695
  %v2330 = vpow.pop %v2329
  %v2331 = vmul.f32 %v2115, 1.442695
  %v2332 = vpow.pop %v2331
  %v2333 = vmul.f32 %v2116, 1.442695
  %v2334 = vpow.pop %v2333
  %v2335 = vmul.f32 %v2117, 1.442695
  %v2336 = vpow.pop %v2335
  %v2337 = vmul.f32 %v2118, 1.442695
  %v2338 = vpow.pop %v2337
  %v2339 = vmul.f32 %v2119, 1.442695
  %v2340 = vpow.pop %v2339
  %v2341 = vmul.f32 %v2120, 1.442695
  %v2342 = vpow.pop %v2341
  %v2343 = vmul.f32 %v2121, 1.442695
  %v2344 = vpow.pop %v2343
  %v2345 = vmul.f32 %v2122, 1.442695
  %v2346 = vpow.pop %v2345
  %v2347 = vmul.f32 %v2123, 1.442695
  %v2348 = vpow.pop %v2347
  %v2349 = vmul.f32 %v2124, 1.442695
  %v2350 = vpow.pop %v2349
  %v2351 = vmul.f32 %v2125, 1.442695
  %v2352 = vpow.pop %v2351
  %v2353 = vmul.f32 %v2126, 1.442695
  %v2354 = vpow.pop %v2353
  %v2355 = vmul.f32 %v2127, 1.442695
  %v2356 = vpow.pop %v2355
  %v2357 = vmul.f32 %v2128, 1.442695
  %v2358 = vpow.pop %v2357
  %v2359 = vmul.f32 %v2129, 1.442695
  %v2360 = vpow.pop %v2359
  %v2361 = vmul.f32 %v2130, 1.442695
  %v2362 = vpow.pop %v2361
  %v2363 = vmul.f32 %v2131, 1.442695
  %v2364 = vpow.pop %v2363
  %v2365 = vmul.f32 %v2132, 1.442695
  %v2366 = vpow.pop %v2365
  %v2367 = vmul.f32 %v2133, 1.442695
  %v2368 = vpow.pop %v2367
  %v2369 = vmul.f32 %v2134, 1.442695
  %v2370 = vpow.pop %v2369
  %v2371 = vmul.f32 %v2135, 1.442695
  %v2372 = vpow.pop %v2371
  %v2373 = vmul.f32 %v2136, 1.442695
  %v2374 = vpow.pop %v2373
  %v2375 = vmul.f32 %v2137, 1.442695
  %v2376 = vpow.pop %v2375
  %v2377 = vmul.f32 %v2138, 1.442695
  %v2378 = vpow.pop %v2377
  %v2379 = vmul.f32 %v2139, 1.442695
  %v2380 = vpow.pop %v2379
  %v2381 = vmul.f32 %v2140, 1.442695
  %v2382 = vpow.pop %v2381
  %v2383 = vmul.f32 %v2141, 1.442695
  %v2384 = vpow.pop %v2383
  %v2385 = vmul.f32 %v2142, 1.442695
  %v2386 = vpow.pop %v2385
  %v2387 = vmul.f32 %v2143, 1.442695
  %v2388 = vpow.pop %v2387
  %v2389 = vmul.f32 %v2144, 1.442695
  %v2390 = vpow.pop %v2389
  %v2391 = vmul.f32 %v2145, 1.442695
  %v2392 = vpow.pop %v2391
  %v2393 = vmul.f32 %v2146, 1.442695
  %v2394 = vpow.pop %v2393
  %v2395 = vmul.f32 %v2147, 1.442695
  %v2396 = vpow.pop %v2395
  %v2397 = vmul.f32 %v2148, 1.442695
  %v2398 = vpow.pop %v2397
  %v2399 = vmul.f32 %v2149, 1.442695
  %v2400 = vpow.pop %v2399
  %v2401 = vmul.f32 %v2150, 1.442695
  %v2402 = vpow.pop %v2401
  %v2403 = vmul.f32 %v2151, 1.442695
  %v2404 = vpow.pop %v2403
  %v2405 = vmul.f32 %v2152, 1.442695
  %v2406 = vpow.pop %v2405
  %v2407 = vmul.f32 %v2153, 1.442695
  %v2408 = vpow.pop %v2407
  %v2409 = vmul.f32 %v2154, 1.442695
  %v2410 = vpow.pop %v2409
  %v2411 = vadd.f32 %v2156, 1.0
  %v2412 = vadd.f32 %v2158, 1.0
  %v2413 = vadd.f32 %v2160, 1.0
  %v2414 = vadd.f32 %v2162, 1.0
  %v2415 = vadd.f32 %v2164, 1.0
  %v2416 = vadd.f32 %v2166, 1.0
  %v2417 = vadd.f32 %v2168, 1.0
  %v2418 = vadd.f32 %v2170, 1.0
  %v2419 = vadd.f32 %v2172, 1.0
  %v2420 = vadd.f32 %v2174, 1.0
  %v2421 = vadd.f32 %v2176, 1.0
  %v2422 = vadd.f32 %v2178, 1.0
  %v2423 = vadd.f32 %v2180, 1.0
  %v2424 = vadd.f32 %v2182, 1.0
  %v2425 = vadd.f32 %v2184, 1.0
  %v2426 = vadd.f32 %v2186, 1.0
  %v2427 = vadd.f32 %v2188, 1.0
  %v2428 = vadd.f32 %v2190, 1.0
  %v2429 = vadd.f32 %v2192, 1.0
  %v2430 = vadd.f32 %v2194, 1.0
  %v2431 = vadd.f32 %v2196, 1.0
  %v2432 = vadd.f32 %v2198, 1.0
  %v2433 = vadd.f32 %v2200, 1.0
  %v2434 = vadd.f32 %v2202, 1.0
  %v2435 = vadd.f32 %v2204, 1.0
  %v2436 = vadd.f32 %v2206, 1.0
  %v2437 = vadd.f32 %v2208, 1.0
  %v2438 = vadd.f32 %v2210, 1.0
  %v2439 = vadd.f32 %v2212, 1.0
  %v2440 = vadd.f32 %v2214, 1.0
  %v2441 = vadd.f32 %v2216, 1.0
  %v2442 = vadd.f32 %v2218, 1.0
  %v2443 = vadd.f32 %v2220, 1.0
  %v2444 = vadd.f32 %v2222, 1.0
  %v2445 = vadd.f32 %v2224, 1.0
  %v2446 = vadd.f32 %v2226, 1.0
  %v2447 = vadd.f32 %v2228, 1.0
  %v2448 = vadd.f32 %v2230, 1.0
  %v2449 = vadd.f32 %v2232, 1.0
  %v2450 = vadd.f32 %v2234, 1.0
  %v2451 = vadd.f32 %v2236, 1.0
  %v2452 = vadd.f32 %v2238, 1.0
  %v2453 = vadd.f32 %v2240, 1.0
  %v2454 = vadd.f32 %v2242, 1.0
  %v2455 = vadd.f32 %v2244, 1.0
  %v2456 = vadd.f32 %v2246, 1.0
  %v2457 = vadd.f32 %v2248, 1.0
  %v2458 = vadd.f32 %v2250, 1.0
  %v2459 = vadd.f32 %v2252, 1.0
  %v2460 = vadd.f32 %v2254, 1.0
  %v2461 = vadd.f32 %v2256, 1.0
  %v2462 = vadd.f32 %v2258, 1.0
  %v2463 = vadd.f32 %v2260, 1.0
  %v2464 = vadd.f32 %v2262, 1.0
  %v2465 = vadd.f32 %v2264, 1.0
  %v2466 = vadd.f32 %v2266, 1.0
  %v2467 = vadd.f32 %v2268, 1.0
  %v2468 = vadd.f32 %v2270, 1.0
  %v2469 = vadd.f32 %v2272, 1.0
  %v2470 = vadd.f32 %v2274, 1.0
  %v2471 = vadd.f32 %v2276, 1.0
  %v2472 = vadd.f32 %v2278, 1.0
  %v2473 = vadd.f32 %v2280, 1.0
  %v2474 = vadd.f32 %v2282, 1.0
  %v2475 = vadd.f32 %v2284, 1.0
  %v2476 = vadd.f32 %v2286, 1.0
  %v2477 = vadd.f32 %v2288, 1.0
  %v2478 = vadd.f32 %v2290, 1.0
  %v2479 = vadd.f32 %v2292, 1.0
  %v2480 = vadd.f32 %v2294, 1.0
  %v2481 = vadd.f32 %v2296, 1.0
  %v2482 = vadd.f32 %v2298, 1.0
  %v2483 = vadd.f32 %v2300, 1.0
  %v2484 = vadd.f32 %v2302, 1.0
  %v2485 = vadd.f32 %v2304, 1.0
  %v2486 = vadd.f32 %v2306, 1.0
  %v2487 = vadd.f32 %v2308, 1.0
  %v2488 = vadd.f32 %v2310, 1.0
  %v2489 = vadd.f32 %v2312, 1.0
  %v2490 = vadd.f32 %v2314, 1.0
  %v2491 = vadd.f32 %v2316, 1.0
  %v2492 = vadd.f32 %v2318, 1.0
  %v2493 = vadd.f32 %v2320, 1.0
  %v2494 = vadd.f32 %v2322, 1.0
  %v2495 = vadd.f32 %v2324, 1.0
  %v2496 = vadd.f32 %v2326, 1.0
  %v2497 = vadd.f32 %v2328, 1.0
  %v2498 = vadd.f32 %v2330, 1.0
  %v2499 = vadd.f32 %v2332, 1.0
  %v2500 = vadd.f32 %v2334, 1.0
  %v2501 = vadd.f32 %v2336, 1.0
  %v2502 = vadd.f32 %v2338, 1.0
  %v2503 = vadd.f32 %v2340, 1.0
  %v2504 = vadd.f32 %v2342, 1.0
  %v2505 = vadd.f32 %v2344, 1.0
  %v2506 = vadd.f32 %v2346, 1.0
  %v2507 = vadd.f32 %v2348, 1.0
  %v2508 = vadd.f32 %v2350, 1.0
  %v2509 = vadd.f32 %v2352, 1.0
  %v2510 = vadd.f32 %v2354, 1.0
  %v2511 = vadd.f32 %v2356, 1.0
  %v2512 = vadd.f32 %v2358, 1.0
  %v2513 = vadd.f32 %v2360, 1.0
  %v2514 = vadd.f32 %v2362, 1.0
  %v2515 = vadd.f32 %v2364, 1.0
  %v2516 = vadd.f32 %v2366, 1.0
  %v2517 = vadd.f32 %v2368, 1.0
  %v2518 = vadd.f32 %v2370, 1.0
  %v2519 = vadd.f32 %v2372, 1.0
  %v2520 = vadd.f32 %v2374, 1.0
  %v2521 = vadd.f32 %v2376, 1.0
  %v2522 = vadd.f32 %v2378, 1.0
  %v2523 = vadd.f32 %v2380, 1.0
  %v2524 = vadd.f32 %v2382, 1.0
  %v2525 = vadd.f32 %v2384, 1.0
  %v2526 = vadd.f32 %v2386, 1.0
  %v2527 = vadd.f32 %v2388, 1.0
  %v2528 = vadd.f32 %v2390, 1.0
  %v2529 = vadd.f32 %v2392, 1.0
  %v2530 = vadd.f32 %v2394, 1.0
  %v2531 = vadd.f32 %v2396, 1.0
  %v2532 = vadd.f32 %v2398, 1.0
  %v2533 = vadd.f32 %v2400, 1.0
  %v2534 = vadd.f32 %v2402, 1.0
  %v2535 = vadd.f32 %v2404, 1.0
  %v2536 = vadd.f32 %v2406, 1.0
  %v2537 = vadd.f32 %v2408, 1.0
  %v2538 = vadd.f32 %v2410, 1.0
  %v2539 = vrcp.pop %v2411
  %v2540 = vmul.f32 1.0, %v2539
  %v2541 = vrcp.pop %v2412
  %v2542 = vmul.f32 1.0, %v2541
  %v2543 = vrcp.pop %v2413
  %v2544 = vmul.f32 1.0, %v2543
  %v2545 = vrcp.pop %v2414
  %v2546 = vmul.f32 1.0, %v2545
  %v2547 = vrcp.pop %v2415
  %v2548 = vmul.f32 1.0, %v2547
  %v2549 = vrcp.pop %v2416
  %v2550 = vmul.f32 1.0, %v2549
  %v2551 = vrcp.pop %v2417
  %v2552 = vmul.f32 1.0, %v2551
  %v2553 = vrcp.pop %v2418
  %v2554 = vmul.f32 1.0, %v2553
  %v2555 = vrcp.pop %v2419
  %v2556 = vmul.f32 1.0, %v2555
  %v2557 = vrcp.pop %v2420
  %v2558 = vmul.f32 1.0, %v2557
  %v2559 = vrcp.pop %v2421
  %v2560 = vmul.f32 1.0, %v2559
  %v2561 = vrcp.pop %v2422
  %v2562 = vmul.f32 1.0, %v2561
  %v2563 = vrcp.pop %v2423
  %v2564 = vmul.f32 1.0, %v2563
  %v2565 = vrcp.pop %v2424
  %v2566 = vmul.f32 1.0, %v2565
  %v2567 = vrcp.pop %v2425
  %v2568 = vmul.f32 1.0, %v2567
  %v2569 = vrcp.pop %v2426
  %v2570 = vmul.f32 1.0, %v2569
  %v2571 = vrcp.pop %v2427
  %v2572 = vmul.f32 1.0, %v2571
  %v2573 = vrcp.pop %v2428
  %v2574 = vmul.f32 1.0, %v2573
  %v2575 = vrcp.pop %v2429
  %v2576 = vmul.f32 1.0, %v2575
  %v2577 = vrcp.pop %v2430
  %v2578 = vmul.f32 1.0, %v2577
  %v2579 = vrcp.pop %v2431
  %v2580 = vmul.f32 1.0, %v2579
  %v2581 = vrcp.pop %v2432
  %v2582 = vmul.f32 1.0, %v2581
  %v2583 = vrcp.pop %v2433
  %v2584 = vmul.f32 1.0, %v2583
  %v2585 = vrcp.pop %v2434
  %v2586 = vmul.f32 1.0, %v2585
  %v2587 = vrcp.pop %v2435
  %v2588 = vmul.f32 1.0, %v2587
  %v2589 = vrcp.pop %v2436
  %v2590 = vmul.f32 1.0, %v2589
  %v2591 = vrcp.pop %v2437
  %v2592 = vmul.f32 1.0, %v2591
  %v2593 = vrcp.pop %v2438
  %v2594 = vmul.f32 1.0, %v2593
  %v2595 = vrcp.pop %v2439
  %v2596 = vmul.f32 1.0, %v2595
  %v2597 = vrcp.pop %v2440
  %v2598 = vmul.f32 1.0, %v2597
  %v2599 = vrcp.pop %v2441
  %v2600 = vmul.f32 1.0, %v2599
  %v2601 = vrcp.pop %v2442
  %v2602 = vmul.f32 1.0, %v2601
  %v2603 = vrcp.pop %v2443
  %v2604 = vmul.f32 1.0, %v2603
  %v2605 = vrcp.pop %v2444
  %v2606 = vmul.f32 1.0, %v2605
  %v2607 = vrcp.pop %v2445
  %v2608 = vmul.f32 1.0, %v2607
  %v2609 = vrcp.pop %v2446
  %v2610 = vmul.f32 1.0, %v2609
  %v2611 = vrcp.pop %v2447
  %v2612 = vmul.f32 1.0, %v2611
  %v2613 = vrcp.pop %v2448
  %v2614 = vmul.f32 1.0, %v2613
  %v2615 = vrcp.pop %v2449
  %v2616 = vmul.f32 1.0, %v2615
  %v2617 = vrcp.pop %v2450
  %v2618 = vmul.f32 1.0, %v2617
  %v2619 = vrcp.pop %v2451
  %v2620 = vmul.f32 1.0, %v2619
  %v2621 = vrcp.pop %v2452
  %v2622 = vmul.f32 1.0, %v2621
  %v2623 = vrcp.pop %v2453
  %v2624 = vmul.f32 1.0, %v2623
  %v2625 = vrcp.pop %v2454
  %v2626 = vmul.f32 1.0, %v2625
  %v2627 = vrcp.pop %v2455
  %v2628 = vmul.f32 1.0, %v2627
  %v2629 = vrcp.pop %v2456
  %v2630 = vmul.f32 1.0, %v2629
  %v2631 = vrcp.pop %v2457
  %v2632 = vmul.f32 1.0, %v2631
  %v2633 = vrcp.pop %v2458
  %v2634 = vmul.f32 1.0, %v2633
  %v2635 = vrcp.pop %v2459
  %v2636 = vmul.f32 1.0, %v2635
  %v2637 = vrcp.pop %v2460
  %v2638 = vmul.f32 1.0, %v2637
  %v2639 = vrcp.pop %v2461
  %v2640 = vmul.f32 1.0, %v2639
  %v2641 = vrcp.pop %v2462
  %v2642 = vmul.f32 1.0, %v2641
  %v2643 = vrcp.pop %v2463
  %v2644 = vmul.f32 1.0, %v2643
  %v2645 = vrcp.pop %v2464
  %v2646 = vmul.f32 1.0, %v2645
  %v2647 = vrcp.pop %v2465
  %v2648 = vmul.f32 1.0, %v2647
  %v2649 = vrcp.pop %v2466
  %v2650 = vmul.f32 1.0, %v2649
  %v2651 = vrcp.pop %v2467
  %v2652 = vmul.f32 1.0, %v2651
  %v2653 = vrcp.pop %v2468
  %v2654 = vmul.f32 1.0, %v2653
  %v2655 = vrcp.pop %v2469
  %v2656 = vmul.f32 1.0, %v2655
  %v2657 = vrcp.pop %v2470
  %v2658 = vmul.f32 1.0, %v2657
  %v2659 = vrcp.pop %v2471
  %v2660 = vmul.f32 1.0, %v2659
  %v2661 = vrcp.pop %v2472
  %v2662 = vmul.f32 1.0, %v2661
  %v2663 = vrcp.pop %v2473
  %v2664 = vmul.f32 1.0, %v2663
  %v2665 = vrcp.pop %v2474
  %v2666 = vmul.f32 1.0, %v2665
  %v2667 = vrcp.pop %v2475
  %v2668 = vmul.f32 1.0, %v2667
  %v2669 = vrcp.pop %v2476
  %v2670 = vmul.f32 1.0, %v2669
  %v2671 = vrcp.pop %v2477
  %v2672 = vmul.f32 1.0, %v2671
  %v2673 = vrcp.pop %v2478
  %v2674 = vmul.f32 1.0, %v2673
  %v2675 = vrcp.pop %v2479
  %v2676 = vmul.f32 1.0, %v2675
  %v2677 = vrcp.pop %v2480
  %v2678 = vmul.f32 1.0, %v2677
  %v2679 = vrcp.pop %v2481
  %v2680 = vmul.f32 1.0, %v2679
  %v2681 = vrcp.pop %v2482
  %v2682 = vmul.f32 1.0, %v2681
  %v2683 = vrcp.pop %v2483
  %v2684 = vmul.f32 1.0, %v2683
  %v2685 = vrcp.pop %v2484
  %v2686 = vmul.f32 1.0, %v2685
  %v2687 = vrcp.pop %v2485
  %v2688 = vmul.f32 1.0, %v2687
  %v2689 = vrcp.pop %v2486
  %v2690 = vmul.f32 1.0, %v2689
  %v2691 = vrcp.pop %v2487
  %v2692 = vmul.f32 1.0, %v2691
  %v2693 = vrcp.pop %v2488
  %v2694 = vmul.f32 1.0, %v2693
  %v2695 = vrcp.pop %v2489
  %v2696 = vmul.f32 1.0, %v2695
  %v2697 = vrcp.pop %v2490
  %v2698 = vmul.f32 1.0, %v2697
  %v2699 = vrcp.pop %v2491
  %v2700 = vmul.f32 1.0, %v2699
  %v2701 = vrcp.pop %v2492
  %v2702 = vmul.f32 1.0, %v2701
  %v2703 = vrcp.pop %v2493
  %v2704 = vmul.f32 1.0, %v2703
  %v2705 = vrcp.pop %v2494
  %v2706 = vmul.f32 1.0, %v2705
  %v2707 = vrcp.pop %v2495
  %v2708 = vmul.f32 1.0, %v2707
  %v2709 = vrcp.pop %v2496
  %v2710 = vmul.f32 1.0, %v2709
  %v2711 = vrcp.pop %v2497
  %v2712 = vmul.f32 1.0, %v2711
  %v2713 = vrcp.pop %v2498
  %v2714 = vmul.f32 1.0, %v2713
  %v2715 = vrcp.pop %v2499
  %v2716 = vmul.f32 1.0, %v2715
  %v2717 = vrcp.pop %v2500
  %v2718 = vmul.f32 1.0, %v2717
  %v2719 = vrcp.pop %v2501
  %v2720 = vmul.f32 1.0, %v2719
  %v2721 = vrcp.pop %v2502
  %v2722 = vmul.f32 1.0, %v2721
  %v2723 = vrcp.pop %v2503
  %v2724 = vmul.f32 1.0, %v2723
  %v2725 = vrcp.pop %v2504
  %v2726 = vmul.f32 1.0, %v2725
  %v2727 = vrcp.pop %v2505
  %v2728 = vmul.f32 1.0, %v2727
  %v2729 = vrcp.pop %v2506
  %v2730 = vmul.f32 1.0, %v2729
  %v2731 = vrcp.pop %v2507
  %v2732 = vmul.f32 1.0, %v2731
  %v2733 = vrcp.pop %v2508
  %v2734 = vmul.f32 1.0, %v2733
  %v2735 = vrcp.pop %v2509
  %v2736 = vmul.f32 1.0, %v2735
  %v2737 = vrcp.pop %v2510
  %v2738 = vmul.f32 1.0, %v2737
  %v2739 = vrcp.pop %v2511
  %v2740 = vmul.f32 1.0, %v2739
  %v2741 = vrcp.pop %v2512
  %v2742 = vmul.f32 1.0, %v2741
  %v2743 = vrcp.pop %v2513
  %v2744 = vmul.f32 1.0, %v2743
  %v2745 = vrcp.pop %v2514
  %v2746 = vmul.f32 1.0, %v2745
  %v2747 = vrcp.pop %v2515
  %v2748 = vmul.f32 1.0, %v2747
  %v2749 = vrcp.pop %v2516
  %v2750 = vmul.f32 1.0, %v2749
  %v2751 = vrcp.pop %v2517
  %v2752 = vmul.f32 1.0, %v2751
  %v2753 = vrcp.pop %v2518
  %v2754 = vmul.f32 1.0, %v2753
  %v2755 = vrcp.pop %v2519
  %v2756 = vmul.f32 1.0, %v2755
  %v2757 = vrcp.pop %v2520
  %v2758 = vmul.f32 1.0, %v2757
  %v2759 = vrcp.pop %v2521
  %v2760 = vmul.f32 1.0, %v2759
  %v2761 = vrcp.pop %v2522
  %v2762 = vmul.f32 1.0, %v2761
  %v2763 = vrcp.pop %v2523
  %v2764 = vmul.f32 1.0, %v2763
  %v2765 = vrcp.pop %v2524
  %v2766 = vmul.f32 1.0, %v2765
  %v2767 = vrcp.pop %v2525
  %v2768 = vmul.f32 1.0, %v2767
  %v2769 = vrcp.pop %v2526
  %v2770 = vmul.f32 1.0, %v2769
  %v2771 = vrcp.pop %v2527
  %v2772 = vmul.f32 1.0, %v2771
  %v2773 = vrcp.pop %v2528
  %v2774 = vmul.f32 1.0, %v2773
  %v2775 = vrcp.pop %v2529
  %v2776 = vmul.f32 1.0, %v2775
  %v2777 = vrcp.pop %v2530
  %v2778 = vmul.f32 1.0, %v2777
  %v2779 = vrcp.pop %v2531
  %v2780 = vmul.f32 1.0, %v2779
  %v2781 = vrcp.pop %v2532
  %v2782 = vmul.f32 1.0, %v2781
  %v2783 = vrcp.pop %v2533
  %v2784 = vmul.f32 1.0, %v2783
  %v2785 = vrcp.pop %v2534
  %v2786 = vmul.f32 1.0, %v2785
  %v2787 = vrcp.pop %v2535
  %v2788 = vmul.f32 1.0, %v2787
  %v2789 = vrcp.pop %v2536
  %v2790 = vmul.f32 1.0, %v2789
  %v2791 = vrcp.pop %v2537
  %v2792 = vmul.f32 1.0, %v2791
  %v2793 = vrcp.pop %v2538
  %v2794 = vmul.f32 1.0, %v2793
  %vm2795 = vcmask 7168
  %2796 = vst.msk [vmem:[%s5] sm:$0xff] %vm2795, %v2540
  %2797 = vst.msk [vmem:[%s5 + $0x8] sm:$0xff] %vm2795, %v2542
  %2798 = vst.msk [vmem:[%s5 + $0x10] sm:$0xff] %vm2795, %v2544
  %2799 = vst.msk [vmem:[%s5 + $0x18] sm:$0xff] %vm2795, %v2546
  %2800 = vst.msk [vmem:[%s5 + $0x20] sm:$0xff] %vm2795, %v2548
  %2801 = vst.msk [vmem:[%s5 + $0x28] sm:$0xff] %vm2795, %v2550
  %2802 = vst.msk [vmem:[%s5 + $0x30] sm:$0xff] %vm2795, %v2552
  %2803 = vst.msk [vmem:[%s5 + $0x38] sm:$0xff] %vm2795, %v2554
  %2804 = vst.msk [vmem:[%s5 + $0x40] sm:$0xff] %vm2795, %v2556
  %2805 = vst.msk [vmem:[%s5 + $0x48] sm:$0xff] %vm2795, %v2558
  %2806 = vst.msk [vmem:[%s5 + $0x50] sm:$0xff] %vm2795, %v2560
  %2807 = vst.msk [vmem:[%s5 + $0x58] sm:$0xff] %vm2795, %v2562
  %2808 = vst.msk [vmem:[%s5 + $0x60] sm:$0xff] %vm2795, %v2564
  %2809 = vst.msk [vmem:[%s5 + $0x68] sm:$0xff] %vm2795, %v2566
  %2810 = vst.msk [vmem:[%s5 + $0x70] sm:$0xff] %vm2795, %v2568
  %2811 = vst.msk [vmem:[%s5 + $0x78] sm:$0xff] %vm2795, %v2570
  %2812 = vst.msk [vmem:[%s5 + $0x80] sm:$0xff] %vm2795, %v2572
  %2813 = vst.msk [vmem:[%s5 + $0x88] sm:$0xff] %vm2795, %v2574
  %2814 = vst.msk [vmem:[%s5 + $0x90] sm:$0xff] %vm2795, %v2576
  %2815 = vst.msk [vmem:[%s5 + $0x98] sm:$0xff] %vm2795, %v2578
  %2816 = vst.msk [vmem:[%s5 + $0xa0] sm:$0xff] %vm2795, %v2580
  %2817 = vst.msk [vmem:[%s5 + $0xa8] sm:$0xff] %vm2795, %v2582
  %2818 = vst.msk [vmem:[%s5 + $0xb0] sm:$0xff] %vm2795, %v2584
  %2819 = vst.msk [vmem:[%s5 + $0xb8] sm:$0xff] %vm2795, %v2586
  %2820 = vst.msk [vmem:[%s5 + $0xc0] sm:$0xff] %vm2795, %v2588
  %2821 = vst.msk [vmem:[%s5 + $0xc8] sm:$0xff] %vm2795, %v2590
  %2822 = vst.msk [vmem:[%s5 + $0xd0] sm:$0xff] %vm2795, %v2592
  %2823 = vst.msk [vmem:[%s5 + $0xd8] sm:$0xff] %vm2795, %v2594
  %2824 = vst.msk [vmem:[%s5 + $0xe0] sm:$0xff] %vm2795, %v2596
  %2825 = vst.msk [vmem:[%s5 + $0xe8] sm:$0xff] %vm2795, %v2598
  %2826 = vst.msk [vmem:[%s5 + $0xf0] sm:$0xff] %vm2795, %v2600
  %2827 = vst.msk [vmem:[%s5 + $0xf8] sm:$0xff] %vm2795, %v2602
  %2828 = vst.msk [vmem:[%s5 + $0x100] sm:$0xff] %vm2795, %v2604
  %2829 = vst.msk [vmem:[%s5 + $0x108] sm:$0xff] %vm2795, %v2606
  %2830 = vst.msk [vmem:[%s5 + $0x110] sm:$0xff] %vm2795, %v2608
  %2831 = vst.msk [vmem:[%s5 + $0x118] sm:$0xff] %vm2795, %v2610
  %2832 = vst.msk [vmem:[%s5 + $0x120] sm:$0xff] %vm2795, %v2612
  %2833 = vst.msk [vmem:[%s5 + $0x128] sm:$0xff] %vm2795, %v2614
  %2834 = vst.msk [vmem:[%s5 + $0x130] sm:$0xff] %vm2795, %v2616
  %2835 = vst.msk [vmem:[%s5 + $0x138] sm:$0xff] %vm2795, %v2618
  %2836 = vst.msk [vmem:[%s5 + $0x140] sm:$0xff] %vm2795, %v2620
  %2837 = vst.msk [vmem:[%s5 + $0x148] sm:$0xff] %vm2795, %v2622
  %2838 = vst.msk [vmem:[%s5 + $0x150] sm:$0xff] %vm2795, %v2624
  %2839 = vst.msk [vmem:[%s5 + $0x158] sm:$0xff] %vm2795, %v2626
  %2840 = vst.msk [vmem:[%s5 + $0x160] sm:$0xff] %vm2795, %v2628
  %2841 = vst.msk [vmem:[%s5 + $0x168] sm:$0xff] %vm2795, %v2630
  %2842 = vst.msk [vmem:[%s5 + $0x170] sm:$0xff] %vm2795, %v2632
  %2843 = vst.msk [vmem:[%s5 + $0x178] sm:$0xff] %vm2795, %v2634
  %2844 = vst.msk [vmem:[%s5 + $0x180] sm:$0xff] %vm2795, %v2636
  %2845 = vst.msk [vmem:[%s5 + $0x188] sm:$0xff] %vm2795, %v2638
  %2846 = vst.msk [vmem:[%s5 + $0x190] sm:$0xff] %vm2795, %v2640
  %2847 = vst.msk [vmem:[%s5 + $0x198] sm:$0xff] %vm2795, %v2642
  %2848 = vst.msk [vmem:[%s5 + $0x1a0] sm:$0xff] %vm2795, %v2644
  %2849 = vst.msk [vmem:[%s5 + $0x1a8] sm:$0xff] %vm2795, %v2646
  %2850 = vst.msk [vmem:[%s5 + $0x1b0] sm:$0xff] %vm2795, %v2648
  %2851 = vst.msk [vmem:[%s5 + $0x1b8] sm:$0xff] %vm2795, %v2650
  %2852 = vst.msk [vmem:[%s5 + $0x1c0] sm:$0xff] %vm2795, %v2652
  %2853 = vst.msk [vmem:[%s5 + $0x1c8] sm:$0xff] %vm2795, %v2654
  %2854 = vst.msk [vmem:[%s5 + $0x1d0] sm:$0xff] %vm2795, %v2656
  %2855 = vst.msk [vmem:[%s5 + $0x1d8] sm:$0xff] %vm2795, %v2658
  %2856 = vst.msk [vmem:[%s5 + $0x1e0] sm:$0xff] %vm2795, %v2660
  %2857 = vst.msk [vmem:[%s5 + $0x1e8] sm:$0xff] %vm2795, %v2662
  %2858 = vst.msk [vmem:[%s5 + $0x1f0] sm:$0xff] %vm2795, %v2664
  %2859 = vst.msk [vmem:[%s5 + $0x1f8] sm:$0xff] %vm2795, %v2666
  %2860 = vst.msk [vmem:[%s5 + $0x200] sm:$0xff] %vm2795, %v2668
  %2861 = vst.msk [vmem:[%s5 + $0x208] sm:$0xff] %vm2795, %v2670
  %2862 = vst.msk [vmem:[%s5 + $0x210] sm:$0xff] %vm2795, %v2672
  %2863 = vst.msk [vmem:[%s5 + $0x218] sm:$0xff] %vm2795, %v2674
  %2864 = vst.msk [vmem:[%s5 + $0x220] sm:$0xff] %vm2795, %v2676
  %2865 = vst.msk [vmem:[%s5 + $0x228] sm:$0xff] %vm2795, %v2678
  %2866 = vst.msk [vmem:[%s5 + $0x230] sm:$0xff] %vm2795, %v2680
  %2867 = vst.msk [vmem:[%s5 + $0x238] sm:$0xff] %vm2795, %v2682
  %2868 = vst.msk [vmem:[%s5 + $0x240] sm:$0xff] %vm2795, %v2684
  %2869 = vst.msk [vmem:[%s5 + $0x248] sm:$0xff] %vm2795, %v2686
  %2870 = vst.msk [vmem:[%s5 + $0x250] sm:$0xff] %vm2795, %v2688
  %2871 = vst.msk [vmem:[%s5 + $0x258] sm:$0xff] %vm2795, %v2690
  %2872 = vst.msk [vmem:[%s5 + $0x260] sm:$0xff] %vm2795, %v2692
  %2873 = vst.msk [vmem:[%s5 + $0x268] sm:$0xff] %vm2795, %v2694
  %2874 = vst.msk [vmem:[%s5 + $0x270] sm:$0xff] %vm2795, %v2696
  %2875 = vst.msk [vmem:[%s5 + $0x278] sm:$0xff] %vm2795, %v2698
  %2876 = vst.msk [vmem:[%s5 + $0x280] sm:$0xff] %vm2795, %v2700
  %2877 = vst.msk [vmem:[%s5 + $0x288] sm:$0xff] %vm2795, %v2702
  %2878 = vst.msk [vmem:[%s5 + $0x290] sm:$0xff] %vm2795, %v2704
  %2879 = vst.msk [vmem:[%s5 + $0x298] sm:$0xff] %vm2795, %v2706
  %2880 = vst.msk [vmem:[%s5 + $0x2a0] sm:$0xff] %vm2795, %v2708
  %2881 = vst.msk [vmem:[%s5 + $0x2a8] sm:$0xff] %vm2795, %v2710
  %2882 = vst.msk [vmem:[%s5 + $0x2b0] sm:$0xff] %vm2795, %v2712
  %2883 = vst.msk [vmem:[%s5 + $0x2b8] sm:$0xff] %vm2795, %v2714
  %2884 = vst.msk [vmem:[%s5 + $0x2c0] sm:$0xff] %vm2795, %v2716
  %2885 = vst.msk [vmem:[%s5 + $0x2c8] sm:$0xff] %vm2795, %v2718
  %2886 = vst.msk [vmem:[%s5 + $0x2d0] sm:$0xff] %vm2795, %v2720
  %2887 = vst.msk [vmem:[%s5 + $0x2d8] sm:$0xff] %vm2795, %v2722
  %2888 = vst.msk [vmem:[%s5 + $0x2e0] sm:$0xff] %vm2795, %v2724
  %2889 = vst.msk [vmem:[%s5 + $0x2e8] sm:$0xff] %vm2795, %v2726
  %2890 = vst.msk [vmem:[%s5 + $0x2f0] sm:$0xff] %vm2795, %v2728
  %2891 = vst.msk [vmem:[%s5 + $0x2f8] sm:$0xff] %vm2795, %v2730
  %2892 = vst.msk [vmem:[%s5 + $0x300] sm:$0xff] %vm2795, %v2732
  %2893 = vst.msk [vmem:[%s5 + $0x308] sm:$0xff] %vm2795, %v2734
  %2894 = vst.msk [vmem:[%s5 + $0x310] sm:$0xff] %vm2795, %v2736
  %2895 = vst.msk [vmem:[%s5 + $0x318] sm:$0xff] %vm2795, %v2738
  %2896 = vst.msk [vmem:[%s5 + $0x320] sm:$0xff] %vm2795, %v2740
  %2897 = vst.msk [vmem:[%s5 + $0x328] sm:$0xff] %vm2795, %v2742
  %2898 = vst.msk [vmem:[%s5 + $0x330] sm:$0xff] %vm2795, %v2744
  %2899 = vst.msk [vmem:[%s5 + $0x338] sm:$0xff] %vm2795, %v2746
  %2900 = vst.msk [vmem:[%s5 + $0x340] sm:$0xff] %vm2795, %v2748
  %2901 = vst.msk [vmem:[%s5 + $0x348] sm:$0xff] %vm2795, %v2750
  %2902 = vst.msk [vmem:[%s5 + $0x350] sm:$0xff] %vm2795, %v2752
  %2903 = vst.msk [vmem:[%s5 + $0x358] sm:$0xff] %vm2795, %v2754
  %2904 = vst.msk [vmem:[%s5 + $0x360] sm:$0xff] %vm2795, %v2756
  %2905 = vst.msk [vmem:[%s5 + $0x368] sm:$0xff] %vm2795, %v2758
  %2906 = vst.msk [vmem:[%s5 + $0x370] sm:$0xff] %vm2795, %v2760
  %2907 = vst.msk [vmem:[%s5 + $0x378] sm:$0xff] %vm2795, %v2762
  %2908 = vst.msk [vmem:[%s5 + $0x380] sm:$0xff] %vm2795, %v2764
  %2909 = vst.msk [vmem:[%s5 + $0x388] sm:$0xff] %vm2795, %v2766
  %2910 = vst.msk [vmem:[%s5 + $0x390] sm:$0xff] %vm2795, %v2768
  %2911 = vst.msk [vmem:[%s5 + $0x398] sm:$0xff] %vm2795, %v2770
  %2912 = vst.msk [vmem:[%s5 + $0x3a0] sm:$0xff] %vm2795, %v2772
  %2913 = vst.msk [vmem:[%s5 + $0x3a8] sm:$0xff] %vm2795, %v2774
  %2914 = vst.msk [vmem:[%s5 + $0x3b0] sm:$0xff] %vm2795, %v2776
  %2915 = vst.msk [vmem:[%s5 + $0x3b8] sm:$0xff] %vm2795, %v2778
  %2916 = vst.msk [vmem:[%s5 + $0x3c0] sm:$0xff] %vm2795, %v2780
  %2917 = vst.msk [vmem:[%s5 + $0x3c8] sm:$0xff] %vm2795, %v2782
  %2918 = vst.msk [vmem:[%s5 + $0x3d0] sm:$0xff] %vm2795, %v2784
  %2919 = vst.msk [vmem:[%s5 + $0x3d8] sm:$0xff] %vm2795, %v2786
  %2920 = vst.msk [vmem:[%s5 + $0x3e0] sm:$0xff] %vm2795, %v2788
  %2921 = vst.msk [vmem:[%s5 + $0x3e8] sm:$0xff] %vm2795, %v2790
  %2922 = vst.msk [vmem:[%s5 + $0x3f0] sm:$0xff] %vm2795, %v2792
  %2923 = vst.msk [vmem:[%s5 + $0x3f8] sm:$0xff] %vm2795, %v2794
  // Predicated region
  $region22: #{tpu_custom_call.1} parent=0 // pred_check
    _
  $region23: #{tpu_custom_call.1} parent=0 // pred_check_branch
    %2925 = sbr.rel (0) target = $region25
  $region24: #{tpu_custom_call.1} parent=0 // pred_region
    _
  $region25: #{tpu_custom_call.1} parent=0 // pred_fallthru
    _
  // Predicated region
  $region26: #{tpu_custom_call.1} parent=0 // pred_check
    _
  $region27: #{tpu_custom_call.1} parent=0 // pred_check_branch
    %2927 = sbr.rel (0) target = $region29
  $region28: #{tpu_custom_call.1} parent=0 // pred_region
    _
  $region29: #{tpu_custom_call.1} parent=0 // pred_fallthru
    _

</llo_original>
